<compile_context>
chip_gen: v7x
topology: tpu7x:2x2x1
jax: 0.10.0
libtpu: 0.0.40
codegen_flags: <defaults>
</compile_context>

<pallas_src>
import functools
import math

import jax
import jax.numpy as jnp
from jax.experimental import pallas as pl
from jax.experimental.pallas import tpu as pltpu

_TILE = 512            # node-padding granule for large graphs
_MAX_TILE = 1024       # preferred matmul tile (bf16 operands keep it within v7x VMEM)


def _vmem_capacity_bytes():
    try:
        return int(pltpu.get_tpu_info().vmem_capacity_bytes)
    except Exception:
        return 64 * 1024 * 1024           # conservative (v7x-class) fallback


_VMEM_CAP = _vmem_capacity_bytes()
if _VMEM_CAP <= 72 * 1024 * 1024:         # v7x: 64 MiB per TensorCore
    VMEM_LIMIT = 40 * 1024 * 1024
else:                                     # v5e / v6e: 128 MiB per TensorCore
    VMEM_LIMIT = 96 * 1024 * 1024
_FUSED_VMEM_BUDGET = VMEM_LIMIT - 12 * 1024 * 1024   # headroom for Mosaic scratch


def _round_up(n, m):
    return ((n + m - 1) // m) * m


def _node_pad(n):
    # Node dim is both the sublane axis of activations and the lane/K axis of A blocks:
    # pad to multiples of 128 so every block is lane-dense (unmasked vld/vst, full MXU K).
    if n <= _TILE:
        return max(128, _round_up(n, 128))
    return _round_up(n, _TILE)


def _pick_tile(np_, pref=_MAX_TILE):
    for t in (pref, 512, 256, 128):
        if t <= np_ and np_ % t == 0:
            return t
    return np_


def _pad_to(x, shape):
    return jnp.pad(x, [(0, s - d) for s, d in zip(shape, x.shape)])


# ----------------------------- Pallas kernels -----------------------------

def _gcn_conv_kernel(a_ref, xw_ref, b_ref, o_ref, acc_ref, *, relu):
    # One GCNConv aggregation, K-tiled over source nodes: acc += A[i,k] @ XW[k].
    # A and XW stream as bf16; accumulation and output are f32.
    k = pl.program_id(1)
    nk = pl.num_programs(1)

    @pl.when(k == 0)
    def _():
        acc_ref[...] = jnp.zeros_like(acc_ref)

    acc_ref[...] += jnp.dot(a_ref[...], xw_ref[...],
                            preferred_element_type=jnp.float32)

    @pl.when(k == nk - 1)
    def _():
        out = acc_ref[...] + b_ref[...]
        if relu:
            out = jnp.maximum(out, 0.0)
        o_ref[...] = out


def _aa_kernel(a_ref, b_ref, o_ref, acc_ref, *, zero_diag):
    # Tiled A @ A (bf16 operands, f32 acc) with the "drop result diagonal" mask fused
    # into the epilogue.  NOTE: program ids are read at the top of the body (never
    # inside a pl.when body -- that breaks lowering).
    i = pl.program_id(0)
    j = pl.program_id(1)
    k = pl.program_id(2)
    nk = pl.num_programs(2)

    @pl.when(k == 0)
    def _():
        acc_ref[...] = jnp.zeros_like(acc_ref)

    acc_ref[...] += jnp.dot(a_ref[...], b_ref[...],
                            preferred_element_type=jnp.float32)

    @pl.when(k == nk - 1)
    def _():
        out = acc_ref[...]
        if zero_diag:
            tm, tn = acc_ref.shape
            rows = jax.lax.broadcasted_iota(jnp.int32, (tm, tn), 0) + i * tm
            cols = jax.lax.broadcasted_iota(jnp.int32, (tm, tn), 1) + j * tn
            out = jnp.where(rows == cols, 0.0, out)
        o_ref[...] = out


def _deriv_stack_kernel(relu_ref, save_ref, add_ref,        # SMEM scalar prefetch flags
                        a_ref, x0_ref, w_ref, b_ref,        # inputs
                        o_ref,                              # output
                        x_s, t_s):                          # VMEM scratch (state)
    # Fused 10-layer derivative solver: A_hat (bf16) and the activation state stay
    # resident in VMEM, weights stream per layer along the grid axis, per-layer
    # ReLU / residual behaviour is gated by pl.when on SMEM flags.
    l = pl.program_id(0)
    nl = pl.num_programs(0)

    @pl.when(l == 0)
    def _():
        x_s[...] = x0_ref[...]
        t_s[...] = jnp.zeros_like(t_s)

    xw = jnp.dot(x_s[...], w_ref[0], preferred_element_type=jnp.float32)
    x_s[...] = jnp.dot(a_ref[...], xw.astype(jnp.bfloat16),
                       preferred_element_type=jnp.float32) + b_ref[0]

    # in-block activation (layers 1..n-1 of each GCNBlock)
    @pl.when(relu_ref[l] == 1)
    def _():
        x_s[...] = jnp.maximum(x_s[...], 0.0)

    # save residual x_temp at the first layer of each block
    @pl.when(save_ref[l] == 1)
    def _():
        t_s[...] = x_s[...]

    # sum_res residual add + DerivativeSolver block activation: relu(y + x_temp)
    @pl.when(add_ref[l] == 1)
    def _():
        x_s[...] = jnp.maximum(x_s[...] + t_s[...], 0.0)

    @pl.when(l == nl - 1)
    def _():
        o_ref[...] = x_s[...]


# ----------------------------- conv wrappers -------------------------------

def gcn_conv_padded(a_hat_pad, x, w, b, relu=False):
    """GCNConv A_hat @ (x @ w) + b. XW is computed outside (plain GEMM at the given
    x width) and streamed into a pure A x XW accumulation kernel. Returns the padded
    [Np, co_pad] f32 result (pad rows/cols never leak into real rows because A_hat's
    pad rows/cols are zero)."""
    np_ = a_hat_pad.shape[0]
    c_out = w.shape[1]
    co = _round_up(c_out, 128)

    w_m = w if x.shape[1] == w.shape[0] else _pad_to(w, (x.shape[1], c_out))
    xw = jnp.dot(x, w_m, preferred_element_type=jnp.float32)
    xw_p = _pad_to(xw, (np_, co)).astype(jnp.bfloat16)
    b_p = _pad_to(b.reshape(1, -1), (1, co)).astype(jnp.float32)

    t = _pick_tile(np_)
    return pl.pallas_call(
        functools.partial(_gcn_conv_kernel, relu=relu),
        out_shape=jax.ShapeDtypeStruct((np_, co), jnp.float32),
        grid_spec=pltpu.PrefetchScalarGridSpec(
            num_scalar_prefetch=0,
            grid=(np_ // t, np_ // t),
            in_specs=[
                pl.BlockSpec((t, t), lambda i, k: (i, k)),    # A tile streams (bf16)
                pl.BlockSpec((t, co), lambda i, k: (k, 0)),   # XW rows for this K tile
                pl.BlockSpec((1, co), lambda i, k: (0, 0)),   # bias resident
            ],
            out_specs=pl.BlockSpec((t, co), lambda i, k: (i, 0)),
            scratch_shapes=[pltpu.VMEM((t, co), jnp.float32)],
        ),
        compiler_params=pltpu.CompilerParams(
            dimension_semantics=("parallel", "arbitrary"),
            vmem_limit_bytes=VMEM_LIMIT),
    )(a_hat_pad, xw_p, b_p)


def gcn_conv(a_hat_pad, n, x, w, b, relu=False):
    return gcn_conv_padded(a_hat_pad, x, w, b, relu)[:n, :w.shape[1]]


def _square_matmul_zero_diag(a_p_bf16):
    np_ = a_p_bf16.shape[0]
    t = _pick_tile(np_)
    return pl.pallas_call(
        functools.partial(_aa_kernel, zero_diag=True),
        out_shape=jax.ShapeDtypeStruct((np_, np_), jnp.float32),
        grid_spec=pltpu.PrefetchScalarGridSpec(
            num_scalar_prefetch=0,
            grid=(np_ // t, np_ // t, np_ // t),
            in_specs=[pl.BlockSpec((t, t), lambda i, j, k: (i, k)),
                      pl.BlockSpec((t, t), lambda i, j, k: (k, j))],
            out_specs=pl.BlockSpec((t, t), lambda i, j, k: (i, j)),
            scratch_shapes=[pltpu.VMEM((t, t), jnp.float32)],
        ),
        compiler_params=pltpu.CompilerParams(
            dimension_semantics=("parallel", "parallel", "arbitrary"),
            vmem_limit_bytes=VMEM_LIMIT),
    )(a_p_bf16, a_p_bf16)


# ------------------------------ Graph glue --------------------------------

def dense_adj(edge_index, edge_weight, num_nodes):
    src, dst = edge_index[0], edge_index[1]
    a = jnp.zeros((num_nodes, num_nodes), jnp.float32)
    return a.at[dst, src].add(edge_weight)          # A[dst, src] = w(src -> dst)


def gcn_norm_pad(a, improved=False):
    """D^{-1/2} (A + fill*I) D^{-1/2} (PyG gcn_norm), pre-padded to [Np, Np], bf16."""
    n = a.shape[0]
    np_ = _node_pad(n)
    fill = 2.0 if improved else 1.0
    idx = jnp.arange(n)
    a_p = _pad_to(a, (np_, np_)).at[idx, idx].add(fill)
    deg = a_p.sum(axis=1)
    dinv = jnp.where(deg > 0.0, jax.lax.rsqrt(deg), 0.0)
    return (dinv[:, None] * a_p * dinv[None, :]).astype(jnp.bfloat16)


def augment_adj_dense(a):
    # GraphUNet.augment_adj: remove self loops, add self loops, A := A @ A, drop diag.
    n = a.shape[0]
    idx = jnp.arange(n)
    a = a.at[idx, idx].set(1.0)                     # remove + add self loops (weight 1)
    np_ = _node_pad(n)
    a_p = _pad_to(a, (np_, np_)).astype(jnp.bfloat16)
    a2 = _square_matmul_zero_diag(a_p)              # diag drop fused in kernel
    return a2[:n, :n]


def topk_pool(x, a, p, ratio):
    # TopKPooling: score = tanh((x.p)/||p||); keep top ceil(ratio*N) nodes, gate x.
    score = jnp.tanh((x @ p) / jnp.linalg.norm(p))
    k = max(1, int(math.ceil(ratio * x.shape[0])))
    _, perm = jax.lax.top_k(score, k)
    x_new = x[perm] * score[perm][:, None]
    a_new = a[perm][:, perm]
    return x_new, a_new, perm


# --------------------------- Parameter init --------------------------------

def _glorot(key, shape):
    limit = math.sqrt(6.0 / (shape[0] + shape[1]))
    return jax.random.uniform(key, shape, jnp.float32, -limit, limit)


def init_params(key, n_fields, n_hiddenfields, n_meshfields, n_bcfields):
    H = n_hiddenfields
    keys = iter(jax.random.split(key, 64))

    def conv(cin, cout):
        return {"w": _glorot(next(keys), (cin, cout)),
                "b": jnp.zeros((cout,), jnp.float32)}

    depth = 3
    unet = {
        "down": [conv(n_meshfields, H)] + [conv(H, H) for _ in range(depth)],
        "pool_p": [jax.random.uniform(next(keys), (H,), jnp.float32,
                                      -1.0 / math.sqrt(H), 1.0 / math.sqrt(H))
                   for _ in range(depth)],
        "up": [conv(H, H) for _ in range(depth - 1)] + [conv(H, H)],   # out_channels == H
    }
    cin = n_fields + n_hiddenfields + n_bcfields
    deriv = {
        "block1": [conv(cin, H), conv(H, H), conv(H, H)],
        "block2": [conv(H, H) for _ in range(3)],
        "block3": [conv(H, H) for _ in range(3)],
        "F_dot": conv(H, n_fields),
    }
    return {"unet": unet, "deriv": deriv}


# ------------------------------ Forward pass --------------------------------

def graph_unet_forward(p, x, a, depth=3, pool_ratio=0.2):
    # GraphUNet(depth=3, pool_ratios=0.2, sum_res=True, act=relu); convs use improved norm.
    n0 = x.shape[0]
    ah0 = gcn_norm_pad(a, improved=True)            # padded bf16 A_hat, built once per graph
    x = gcn_conv(ah0, n0, x, p["down"][0]["w"], p["down"][0]["b"], relu=True)
    xs, ahs, ns, perms = [x], [ah0], [n0], []
    for i in range(1, depth + 1):
        a = augment_adj_dense(a)
        x, a, perm = topk_pool(x, a, p["pool_p"][i - 1], pool_ratio)
        n_i = x.shape[0]
        ah = gcn_norm_pad(a, improved=True)
        x = gcn_conv(ah, n_i, x, p["down"][i]["w"], p["down"][i]["b"], relu=True)
        if i < depth:
            xs.append(x); ahs.append(ah); ns.append(n_i)
        perms.append(perm)
    for i in range(depth):
        j = depth - 1 - i
        res, ah_j, n_j, perm = xs[j], ahs[j], ns[j], perms[j]
        up = jnp.zeros_like(res).at[perm].set(x)
        x = res + up                                        # sum_res=True
        x = gcn_conv(ah_j, n_j, x, p["up"][i]["w"], p["up"][i]["b"], relu=(i < depth - 1))
    return x


def _deriv_layer_flags(p):
    layers, relu_f, save_f, add_f = [], [], [], []
    for ls, sum_res in ((p["block1"], True), (p["block2"], True), (p["block3"], False)):
        for li, layer in enumerate(ls):
            layers.append(layer)
            relu_f.append(0 if li == 0 else 1)                         # in-block act
            save_f.append(1 if li == 0 else 0)                         # x_temp = conv0 out
            add_f.append(1 if (li == len(ls) - 1 and sum_res) else 0)  # relu(y + x_temp)
        # DerivativeSolver's act after block3 is idempotent (already relu'd) -> no flag.
    layers.append(p["F_dot"]); relu_f.append(0); save_f.append(0); add_f.append(0)
    return (layers, jnp.array(relu_f, jnp.int32),
            jnp.array(save_f, jnp.int32), jnp.array(add_f, jnp.int32))


def derivative_solver_forward(p, a_hat_pad, n, x):
    layers, relu_f, save_f, add_f = _deriv_layer_flags(p)
    np_ = a_hat_pad.shape[0]
    n_fields = p["F_dot"]["w"].shape[1]
    cp = 128
    for l in layers:
        cp = max(cp, _round_up(l["w"].shape[0], 128), _round_up(l["w"].shape[1], 128))

    # TODO(synk): F.dropout(p=0.2) uses PyTorch RNG (functional default training=True);
    # applied as identity here to keep the kernel deterministic.

    # VMEM accounting for the fused path, including the 2-deep pipeline buffering of
    # the grid-invariant A_hat / X0 / output blocks (review fix).
    fused_bytes = (2 * np_ * np_ * 2            # A_hat (bf16), 2 pipeline buffers
                   + 2 * np_ * cp * 4           # X0 (f32), 2 buffers
                   + 2 * np_ * cp * 4           # output (f32), 2 buffers
                   + 2 * np_ * cp * 4           # x_s + t_s scratch
                   + 2 * cp * cp * 4 + 2 * cp * 4)
    if fused_bytes > _FUSED_VMEM_BUDGET:
        # Graph too large for A_hat-resident fusion: per-layer tiled convs; activations
        # stay in the padded lane-dense layout end to end (slice only at the output).
        def block(xi, ls, sum_res):
            x_t = gcn_conv_padded(a_hat_pad, xi, ls[0]["w"], ls[0]["b"], relu=False)
            y = x_t
            for l in ls[1:]:
                y = gcn_conv_padded(a_hat_pad, y, l["w"], l["b"], relu=True)
            return y + x_t if sum_res else y
        h = jnp.maximum(block(x, p["block1"], True), 0.0)
        h = jnp.maximum(block(h, p["block2"], True), 0.0)
        h = jnp.maximum(block(h, p["block3"], False), 0.0)
        out = gcn_conv_padded(a_hat_pad, h, p["F_dot"]["w"], p["F_dot"]["b"], relu=False)
        return out[:n, :n_fields]

    L = len(layers)
    W = jnp.stack([_pad_to(l["w"], (cp, cp)) for l in layers])                  # [L,cp,cp]
    B = jnp.stack([_pad_to(l["b"].reshape(1, -1), (1, cp)) for l in layers])    # [L,1,cp]
    x_p = _pad_to(x, (np_, cp))

    out = pl.pallas_call(
        _deriv_stack_kernel,
        out_shape=jax.ShapeDtypeStruct((np_, cp), jnp.float32),
        grid_spec=pltpu.PrefetchScalarGridSpec(
            num_scalar_prefetch=3,
            grid=(L,),
            in_specs=[
                pl.BlockSpec((np_, np_), lambda l, r, s, a: (0, 0)),      # A_hat resident
                pl.BlockSpec((np_, cp), lambda l, r, s, a: (0, 0)),       # X0 resident
                pl.BlockSpec((1, cp, cp), lambda l, r, s, a: (l, 0, 0)),  # W_l streams
                pl.BlockSpec((1, 1, cp), lambda l, r, s, a: (l, 0, 0)),   # b_l streams
            ],
            out_specs=pl.BlockSpec((np_, cp), lambda l, r, s, a: (0, 0)),
            scratch_shapes=[pltpu.VMEM((np_, cp), jnp.float32),   # activation state
                            pltpu.VMEM((np_, cp), jnp.float32)],  # residual x_temp
        ),
        compiler_params=pltpu.CompilerParams(
            # TODO(synk): the (L,) "arbitrary" grid runs on one TensorCore on v7x; a
            # row-parallel split would need per-layer cross-core state exchange.
            dimension_semantics=("arbitrary",),
            vmem_limit_bytes=VMEM_LIMIT),
    )(relu_f, save_f, add_f, a_hat_pad, x_p, W, B)
    return out[:n, :n_fields]


def parc_reduced_forward(params, F_previous, mesh_features, edge_index, F_bc_current):
    n = mesh_features.shape[0]
    ew = jnp.ones((edge_index.shape[1],), jnp.float32)
    a_raw = dense_adj(edge_index, ew, n)
    feature_map = graph_unet_forward(params["unet"], mesh_features, a_raw)      # [N, H]
    F_current = jnp.concatenate([F_previous, F_bc_current[:, None]], axis=1)    # [N, F+1]
    F_temp = jnp.concatenate([feature_map, F_current], axis=-1)                 # [N, H+F+1]
    a_hat = gcn_norm_pad(a_raw, improved=False)                                 # padded once
    return derivative_solver_forward(params["deriv"], a_hat, n, F_temp)         # [N, F]


# ---------------------------------- main ------------------------------------

if __name__ == "__main__":
    n_fields, n_timesteps, n_hiddenfields, n_meshfields, n_bcfields = 2, 5, 32, 3, 1
    N = 16  # number of graph nodes

    key = jax.random.PRNGKey(0)
    k_par, k_f, k_m, k_bc = jax.random.split(key, 4)
    params = init_params(k_par, n_fields, n_hiddenfields, n_meshfields, n_bcfields)

    # undirected ring graph: edges (i, i+1) in both directions -> edge_index [2, 2N]
    src = jnp.arange(N, dtype=jnp.int32)
    dst = (src + 1) % N
    edge_index = jnp.concatenate([jnp.stack([src, dst]), jnp.stack([dst, src])], axis=1)

    F_previous = jax.random.normal(k_f, (N, n_fields), jnp.float32)
    mesh_features = jax.random.normal(k_m, (N, n_meshfields), jnp.float32)
    F_bc_current = jax.random.normal(k_bc, (N,), jnp.float32)

    fwd = jax.jit(functools.partial(parc_reduced_forward, params))
    F_dot = fwd(F_previous, mesh_features, edge_index, F_bc_current)
    jax.block_until_ready(F_dot)

    assert F_dot.shape == (N, n_fields) and F_dot.dtype == jnp.float32
    assert bool(jnp.all(jnp.isfinite(F_dot)))
    print("KERNEL_OK")
</pallas_src>

<mosaic_0001>
module attributes {stable_mosaic.version = 11 : i64} {
  func.func private @main(%arg0: i32) attributes {dimension_semantics = [#tpu.dimension_semantics<core_parallel>], iteration_bounds = array<i64: 2>, tpu.core_type = #tpu.core_type<sc_scalar_subcore>, window_params = []} {
    return
  }
}

module attributes {stable_mosaic.version = 11 : i64} {
  func.func private @main(%arg0: i32) attributes {dimension_semantics = [#tpu.dimension_semantics<core_parallel>], iteration_bounds = array<i64: 2>, tpu.core_type = #tpu.core_type<sc_scalar_subcore>, window_params = []} {
    return
  }
}

module attributes {stable_mosaic.version = 11 : i64} {
  func.func @_aa_kernel(%arg0: i32, %arg1: i32, %arg2: i32, %arg3: memref<128x128xbf16, #tpu.memory_space<vmem>>, %arg4: memref<128x128xbf16, #tpu.memory_space<vmem>>, %arg5: memref<128x128xf32, #tpu.memory_space<vmem>>, %arg6: memref<128x128xf32, #tpu.memory_space<vmem>>) attributes {dimension_semantics = [#tpu.dimension_semantics<parallel>, #tpu.dimension_semantics<parallel>, #tpu.dimension_semantics<arbitrary>], iteration_bounds = array<i64: 1, 1, 1>, scalar_prefetch = 0 : i64, scratch_operands = 1 : i64, tpu.core_type = #tpu.core_type<tc>, window_params = [{transform_indices = @transform_0, window_bounds = array<i64: 128, 128>}, {transform_indices = @transform_1, window_bounds = array<i64: 128, 128>}, {transform_indices = @transform_2, window_bounds = array<i64: 128, 128>}]} {
    %c0_i32 = arith.constant 0 : i32
    %0 = arith.cmpi eq, %arg2, %c0_i32 : i32
    %1 = arith.extui %0 : i1 to i32
    %c0_i32_0 = arith.constant 0 : i32
    %2 = arith.cmpi ne, %1, %c0_i32_0 : i32
    scf.if %2 {
      %cst_10 = arith.constant 0.000000e+00 : f32
      %12 = vector.broadcast %cst_10 : f32 to vector<128x128xf32>
      %c0_11 = arith.constant 0 : index
      %c0_12 = arith.constant 0 : index
      %13 = vector.load %arg6[%c0_11, %c0_12] : memref<128x128xf32, #tpu.memory_space<vmem>>, vector<128x128xf32>
      tpu.vector_store %arg6[%c0_11, %c0_12], %12 {strides = array<i32>} : memref<128x128xf32, #tpu.memory_space<vmem>>, vector<128x128xf32>,
    } else {
    }
    %c0 = arith.constant 0 : index
    %c0_1 = arith.constant 0 : index
    %3 = vector.load %arg6[%c0, %c0_1] : memref<128x128xf32, #tpu.memory_space<vmem>>, vector<128x128xf32>
    %c0_2 = arith.constant 0 : index
    %c0_3 = arith.constant 0 : index
    %4 = vector.load %arg3[%c0_2, %c0_3] : memref<128x128xbf16, #tpu.memory_space<vmem>>, vector<128x128xbf16>
    %c0_4 = arith.constant 0 : index
    %c0_5 = arith.constant 0 : index
    %5 = vector.load %arg4[%c0_4, %c0_5] : memref<128x128xbf16, #tpu.memory_space<vmem>>, vector<128x128xbf16>
    %cst = arith.constant dense<0.000000e+00> : vector<128x128xf32>
    %6 = tpu.matmul %4, %5, %cst {dimension_numbers = #tpu.dot_dimension_numbers<[1], [0], [0], [1], [0, 0, 1, 1], [], []>} : vector<128x128xbf16>, vector<128x128xbf16>, vector<128x128xf32> -> vector<128x128xf32>
    %7 = arith.addf %3, %6 : vector<128x128xf32>
    %c0_6 = arith.constant 0 : index
    %c0_7 = arith.constant 0 : index
    %8 = vector.load %arg6[%c0_6, %c0_7] : memref<128x128xf32, #tpu.memory_space<vmem>>, vector<128x128xf32>
    tpu.vector_store %arg6[%c0_6, %c0_7], %7 {strides = array<i32>} : memref<128x128xf32, #tpu.memory_space<vmem>>, vector<128x128xf32>,
    %c0_i32_8 = arith.constant 0 : i32
    %9 = arith.cmpi eq, %arg2, %c0_i32_8 : i32
    %10 = arith.extui %9 : i1 to i32
    %c0_i32_9 = arith.constant 0 : i32
    %11 = arith.cmpi ne, %10, %c0_i32_9 : i32
    scf.if %11 {
      %c0_10 = arith.constant 0 : index
      %c0_11 = arith.constant 0 : index
      %12 = vector.load %arg6[%c0_10, %c0_11] : memref<128x128xf32, #tpu.memory_space<vmem>>, vector<128x128xf32>
      %13 = tpu.iota {dimensions = array<i32: 0>} : vector<128x128xi32>
      %c128_i32 = arith.constant 128 : i32
      %14 = arith.muli %arg0, %c128_i32 : i32
      %15 = vector.broadcast %14 : i32 to vector<128x128xi32>
      %16 = arith.addi %13, %15 : vector<128x128xi32>
      %17 = tpu.iota {dimensions = array<i32: 1>} : vector<128x128xi32>
      %c128_i32_12 = arith.constant 128 : i32
      %18 = arith.muli %arg1, %c128_i32_12 : i32
      %19 = vector.broadcast %18 : i32 to vector<128x128xi32>
      %20 = arith.addi %17, %19 : vector<128x128xi32>
      %21 = arith.cmpi eq, %16, %20 : vector<128x128xi32>
      %cst_13 = arith.constant 0.000000e+00 : f32
      %22 = vector.broadcast %cst_13 : f32 to vector<128x128xf32>
      %23 = arith.select %21, %22, %12 : vector<128x128xi1>, vector<128x128xf32>
      %c0_14 = arith.constant 0 : index
      %c0_15 = arith.constant 0 : index
      %24 = vector.load %arg5[%c0_14, %c0_15] : memref<128x128xf32, #tpu.memory_space<vmem>>, vector<128x128xf32>
      tpu.vector_store %arg5[%c0_14, %c0_15], %23 {strides = array<i32>} : memref<128x128xf32, #tpu.memory_space<vmem>>, vector<128x128xf32>,
    } else {
    }
    return
  }
  func.func @transform_0(%arg0: i32, %arg1: i32, %arg2: i32) -> (i32, i32) {
    %c0_i32 = arith.constant 0 : i32
    return %arg0, %arg2 : i32, i32
  }
  func.func @transform_1(%arg0: i32, %arg1: i32, %arg2: i32) -> (i32, i32) {
    %c0_i32 = arith.constant 0 : i32
    return %arg2, %arg1 : i32, i32
  }
  func.func @transform_2(%arg0: i32, %arg1: i32, %arg2: i32) -> (i32, i32) {
    %c0_i32 = arith.constant 0 : i32
    return %arg0, %arg1 : i32, i32
  }
}

module attributes {stable_mosaic.version = 11 : i64} {
  func.func @_gcn_conv_kernel(%arg0: i32, %arg1: i32, %arg2: memref<128x128xbf16, #tpu.memory_space<vmem>>, %arg3: memref<128x128xbf16, #tpu.memory_space<vmem>>, %arg4: memref<1x128xf32, #tpu.memory_space<vmem>>, %arg5: memref<128x128xf32, #tpu.memory_space<vmem>>, %arg6: memref<128x128xf32, #tpu.memory_space<vmem>>) attributes {dimension_semantics = [#tpu.dimension_semantics<parallel>, #tpu.dimension_semantics<arbitrary>], iteration_bounds = array<i64: 1, 1>, scalar_prefetch = 0 : i64, scratch_operands = 1 : i64, tpu.core_type = #tpu.core_type<tc>, window_params = [{transform_indices = @transform_0, window_bounds = array<i64: 128, 128>}, {transform_indices = @transform_1, window_bounds = array<i64: 128, 128>}, {pipeline_mode = #tpu.pipeline_mode<synchronous>, transform_indices = @transform_2, window_bounds = array<i64: 1, 128>}, {transform_indices = @transform_3, window_bounds = array<i64: 128, 128>}]} {
    %c0_i32 = arith.constant 0 : i32
    %0 = arith.cmpi eq, %arg1, %c0_i32 : i32
    %1 = arith.extui %0 : i1 to i32
    %c0_i32_0 = arith.constant 0 : i32
    %2 = arith.cmpi ne, %1, %c0_i32_0 : i32
    scf.if %2 {
      %cst_10 = arith.constant 0.000000e+00 : f32
      %12 = vector.broadcast %cst_10 : f32 to vector<128x128xf32>
      %c0_11 = arith.constant 0 : index
      %c0_12 = arith.constant 0 : index
      %13 = vector.load %arg6[%c0_11, %c0_12] : memref<128x128xf32, #tpu.memory_space<vmem>>, vector<128x128xf32>
      tpu.vector_store %arg6[%c0_11, %c0_12], %12 {strides = array<i32>} : memref<128x128xf32, #tpu.memory_space<vmem>>, vector<128x128xf32>,
    } else {
    }
    %c0 = arith.constant 0 : index
    %c0_1 = arith.constant 0 : index
    %3 = vector.load %arg6[%c0, %c0_1] : memref<128x128xf32, #tpu.memory_space<vmem>>, vector<128x128xf32>
    %c0_2 = arith.constant 0 : index
    %c0_3 = arith.constant 0 : index
    %4 = vector.load %arg2[%c0_2, %c0_3] : memref<128x128xbf16, #tpu.memory_space<vmem>>, vector<128x128xbf16>
    %c0_4 = arith.constant 0 : index
    %c0_5 = arith.constant 0 : index
    %5 = vector.load %arg3[%c0_4, %c0_5] : memref<128x128xbf16, #tpu.memory_space<vmem>>, vector<128x128xbf16>
    %cst = arith.constant dense<0.000000e+00> : vector<128x128xf32>
    %6 = tpu.matmul %4, %5, %cst {dimension_numbers = #tpu.dot_dimension_numbers<[1], [0], [0], [1], [0, 0, 1, 1], [], []>} : vector<128x128xbf16>, vector<128x128xbf16>, vector<128x128xf32> -> vector<128x128xf32>
    %7 = arith.addf %3, %6 : vector<128x128xf32>
    %c0_6 = arith.constant 0 : index
    %c0_7 = arith.constant 0 : index
    %8 = vector.load %arg6[%c0_6, %c0_7] : memref<128x128xf32, #tpu.memory_space<vmem>>, vector<128x128xf32>
    tpu.vector_store %arg6[%c0_6, %c0_7], %7 {strides = array<i32>} : memref<128x128xf32, #tpu.memory_space<vmem>>, vector<128x128xf32>,
    %c0_i32_8 = arith.constant 0 : i32
    %9 = arith.cmpi eq, %arg1, %c0_i32_8 : i32
    %10 = arith.extui %9 : i1 to i32
    %c0_i32_9 = arith.constant 0 : i32
    %11 = arith.cmpi ne, %10, %c0_i32_9 : i32
    scf.if %11 {
      %c0_10 = arith.constant 0 : index
      %c0_11 = arith.constant 0 : index
      %12 = vector.load %arg6[%c0_10, %c0_11] : memref<128x128xf32, #tpu.memory_space<vmem>>, vector<128x128xf32>
      %c0_12 = arith.constant 0 : index
      %c0_13 = arith.constant 0 : index
      %13 = vector.load %arg4[%c0_12, %c0_13] : memref<1x128xf32, #tpu.memory_space<vmem>>, vector<1x128xf32>
      %14 = vector.broadcast %13 : vector<1x128xf32> to vector<128x128xf32>
      %15 = arith.addf %12, %14 : vector<128x128xf32>
      %cst_14 = arith.constant 0.000000e+00 : f32
      %16 = vector.broadcast %cst_14 : f32 to vector<128x128xf32>
      %17 = arith.maximumf %15, %16 : vector<128x128xf32>
      %c0_15 = arith.constant 0 : index
      %c0_16 = arith.constant 0 : index
      %18 = vector.load %arg5[%c0_15, %c0_16] : memref<128x128xf32, #tpu.memory_space<vmem>>, vector<128x128xf32>
      tpu.vector_store %arg5[%c0_15, %c0_16], %17 {strides = array<i32>} : memref<128x128xf32, #tpu.memory_space<vmem>>, vector<128x128xf32>,
    } else {
    }
    return
  }
  func.func @transform_0(%arg0: i32, %arg1: i32) -> (i32, i32) {
    %c0_i32 = arith.constant 0 : i32
    return %arg0, %arg1 : i32, i32
  }
  func.func @transform_1(%arg0: i32, %arg1: i32) -> (i32, i32) {
    %c0_i32 = arith.constant 0 : i32
    %c0_i32_0 = arith.constant 0 : i32
    return %arg1, %c0_i32 : i32, i32
  }
  func.func @transform_2(%arg0: i32, %arg1: i32) -> (i32, i32) {
    %c0_i32 = arith.constant 0 : i32
    %c0_i32_0 = arith.constant 0 : i32
    %c0_i32_1 = arith.constant 0 : i32
    return %c0_i32, %c0_i32_0 : i32, i32
  }
  func.func @transform_3(%arg0: i32, %arg1: i32) -> (i32, i32) {
    %c0_i32 = arith.constant 0 : i32
    %c0_i32_0 = arith.constant 0 : i32
    return %arg0, %c0_i32 : i32, i32
  }
}

module attributes {stable_mosaic.version = 11 : i64} {
  func.func @_gcn_conv_kernel(%arg0: i32, %arg1: i32, %arg2: memref<128x128xbf16, #tpu.memory_space<vmem>>, %arg3: memref<128x128xbf16, #tpu.memory_space<vmem>>, %arg4: memref<1x128xf32, #tpu.memory_space<vmem>>, %arg5: memref<128x128xf32, #tpu.memory_space<vmem>>, %arg6: memref<128x128xf32, #tpu.memory_space<vmem>>) attributes {dimension_semantics = [#tpu.dimension_semantics<parallel>, #tpu.dimension_semantics<arbitrary>], iteration_bounds = array<i64: 1, 1>, scalar_prefetch = 0 : i64, scratch_operands = 1 : i64, tpu.core_type = #tpu.core_type<tc>, window_params = [{transform_indices = @transform_0, window_bounds = array<i64: 128, 128>}, {transform_indices = @transform_1, window_bounds = array<i64: 128, 128>}, {pipeline_mode = #tpu.pipeline_mode<synchronous>, transform_indices = @transform_2, window_bounds = array<i64: 1, 128>}, {transform_indices = @transform_3, window_bounds = array<i64: 128, 128>}]} {
    %c0_i32 = arith.constant 0 : i32
    %0 = arith.cmpi eq, %arg1, %c0_i32 : i32
    %1 = arith.extui %0 : i1 to i32
    %c0_i32_0 = arith.constant 0 : i32
    %2 = arith.cmpi ne, %1, %c0_i32_0 : i32
    scf.if %2 {
      %cst_10 = arith.constant 0.000000e+00 : f32
      %12 = vector.broadcast %cst_10 : f32 to vector<128x128xf32>
      %c0_11 = arith.constant 0 : index
      %c0_12 = arith.constant 0 : index
      %13 = vector.load %arg6[%c0_11, %c0_12] : memref<128x128xf32, #tpu.memory_space<vmem>>, vector<128x128xf32>
      tpu.vector_store %arg6[%c0_11, %c0_12], %12 {strides = array<i32>} : memref<128x128xf32, #tpu.memory_space<vmem>>, vector<128x128xf32>,
    } else {
    }
    %c0 = arith.constant 0 : index
    %c0_1 = arith.constant 0 : index
    %3 = vector.load %arg6[%c0, %c0_1] : memref<128x128xf32, #tpu.memory_space<vmem>>, vector<128x128xf32>
    %c0_2 = arith.constant 0 : index
    %c0_3 = arith.constant 0 : index
    %4 = vector.load %arg2[%c0_2, %c0_3] : memref<128x128xbf16, #tpu.memory_space<vmem>>, vector<128x128xbf16>
    %c0_4 = arith.constant 0 : index
    %c0_5 = arith.constant 0 : index
    %5 = vector.load %arg3[%c0_4, %c0_5] : memref<128x128xbf16, #tpu.memory_space<vmem>>, vector<128x128xbf16>
    %cst = arith.constant dense<0.000000e+00> : vector<128x128xf32>
    %6 = tpu.matmul %4, %5, %cst {dimension_numbers = #tpu.dot_dimension_numbers<[1], [0], [0], [1], [0, 0, 1, 1], [], []>} : vector<128x128xbf16>, vector<128x128xbf16>, vector<128x128xf32> -> vector<128x128xf32>
    %7 = arith.addf %3, %6 : vector<128x128xf32>
    %c0_6 = arith.constant 0 : index
    %c0_7 = arith.constant 0 : index
    %8 = vector.load %arg6[%c0_6, %c0_7] : memref<128x128xf32, #tpu.memory_space<vmem>>, vector<128x128xf32>
    tpu.vector_store %arg6[%c0_6, %c0_7], %7 {strides = array<i32>} : memref<128x128xf32, #tpu.memory_space<vmem>>, vector<128x128xf32>,
    %c0_i32_8 = arith.constant 0 : i32
    %9 = arith.cmpi eq, %arg1, %c0_i32_8 : i32
    %10 = arith.extui %9 : i1 to i32
    %c0_i32_9 = arith.constant 0 : i32
    %11 = arith.cmpi ne, %10, %c0_i32_9 : i32
    scf.if %11 {
      %c0_10 = arith.constant 0 : index
      %c0_11 = arith.constant 0 : index
      %12 = vector.load %arg6[%c0_10, %c0_11] : memref<128x128xf32, #tpu.memory_space<vmem>>, vector<128x128xf32>
      %c0_12 = arith.constant 0 : index
      %c0_13 = arith.constant 0 : index
      %13 = vector.load %arg4[%c0_12, %c0_13] : memref<1x128xf32, #tpu.memory_space<vmem>>, vector<1x128xf32>
      %14 = vector.broadcast %13 : vector<1x128xf32> to vector<128x128xf32>
      %15 = arith.addf %12, %14 : vector<128x128xf32>
      %c0_14 = arith.constant 0 : index
      %c0_15 = arith.constant 0 : index
      %16 = vector.load %arg5[%c0_14, %c0_15] : memref<128x128xf32, #tpu.memory_space<vmem>>, vector<128x128xf32>
      tpu.vector_store %arg5[%c0_14, %c0_15], %15 {strides = array<i32>} : memref<128x128xf32, #tpu.memory_space<vmem>>, vector<128x128xf32>,
    } else {
    }
    return
  }
  func.func @transform_0(%arg0: i32, %arg1: i32) -> (i32, i32) {
    %c0_i32 = arith.constant 0 : i32
    return %arg0, %arg1 : i32, i32
  }
  func.func @transform_1(%arg0: i32, %arg1: i32) -> (i32, i32) {
    %c0_i32 = arith.constant 0 : i32
    %c0_i32_0 = arith.constant 0 : i32
    return %arg1, %c0_i32 : i32, i32
  }
  func.func @transform_2(%arg0: i32, %arg1: i32) -> (i32, i32) {
    %c0_i32 = arith.constant 0 : i32
    %c0_i32_0 = arith.constant 0 : i32
    %c0_i32_1 = arith.constant 0 : i32
    return %c0_i32, %c0_i32_0 : i32, i32
  }
  func.func @transform_3(%arg0: i32, %arg1: i32) -> (i32, i32) {
    %c0_i32 = arith.constant 0 : i32
    %c0_i32_0 = arith.constant 0 : i32
    return %arg0, %c0_i32 : i32, i32
  }
}

module attributes {stable_mosaic.version = 11 : i64} {
  func.func @_deriv_stack_kernel(%arg0: i32, %arg1: memref<10xi32, #tpu.memory_space<smem>>, %arg2: memref<10xi32, #tpu.memory_space<smem>>, %arg3: memref<10xi32, #tpu.memory_space<smem>>, %arg4: memref<128x128xbf16, #tpu.memory_space<vmem>>, %arg5: memref<128x128xf32, #tpu.memory_space<vmem>>, %arg6: memref<1x128x128xf32, #tpu.memory_space<vmem>>, %arg7: memref<1x1x128xf32, #tpu.memory_space<vmem>>, %arg8: memref<128x128xf32, #tpu.memory_space<vmem>>, %arg9: memref<128x128xf32, #tpu.memory_space<vmem>>, %arg10: memref<128x128xf32, #tpu.memory_space<vmem>>) attributes {dimension_semantics = [#tpu.dimension_semantics<arbitrary>], iteration_bounds = array<i64: 10>, scalar_prefetch = 3 : i64, scratch_operands = 2 : i64, tpu.core_type = #tpu.core_type<tc>, window_params = [{pipeline_mode = #tpu.pipeline_mode<synchronous>, transform_indices = @transform_0, window_bounds = array<i64: 128, 128>}, {pipeline_mode = #tpu.pipeline_mode<synchronous>, transform_indices = @transform_1, window_bounds = array<i64: 128, 128>}, {transform_indices = @transform_2, window_bounds = array<i64: 1, 128, 128>}, {transform_indices = @transform_3, window_bounds = array<i64: 1, 1, 128>}, {pipeline_mode = #tpu.pipeline_mode<synchronous>, transform_indices = @transform_4, window_bounds = array<i64: 128, 128>}]} {
    %c0_i32 = arith.constant 0 : i32
    %0 = arith.cmpi eq, %arg0, %c0_i32 : i32
    %1 = arith.extui %0 : i1 to i32
    %c0_i32_0 = arith.constant 0 : i32
    %2 = arith.cmpi ne, %1, %c0_i32_0 : i32
    scf.if %2 {
      %c0_19 = arith.constant 0 : index
      %c0_20 = arith.constant 0 : index
      %33 = vector.load %arg5[%c0_19, %c0_20] : memref<128x128xf32, #tpu.memory_space<vmem>>, vector<128x128xf32>
      %c0_21 = arith.constant 0 : index
      %c0_22 = arith.constant 0 : index
      %34 = vector.load %arg9[%c0_21, %c0_22] : memref<128x128xf32, #tpu.memory_space<vmem>>, vector<128x128xf32>
      tpu.vector_store %arg9[%c0_21, %c0_22], %33 {strides = array<i32>} : memref<128x128xf32, #tpu.memory_space<vmem>>, vector<128x128xf32>,
      %cst_23 = arith.constant 0.000000e+00 : f32
      %35 = vector.broadcast %cst_23 : f32 to vector<128x128xf32>
      %c0_24 = arith.constant 0 : index
      %c0_25 = arith.constant 0 : index
      %36 = vector.load %arg10[%c0_24, %c0_25] : memref<128x128xf32, #tpu.memory_space<vmem>>, vector<128x128xf32>
      tpu.vector_store %arg10[%c0_24, %c0_25], %35 {strides = array<i32>} : memref<128x128xf32, #tpu.memory_space<vmem>>, vector<128x128xf32>,
    } else {
    }
    %c0 = arith.constant 0 : index
    %c0_1 = arith.constant 0 : index
    %3 = vector.load %arg9[%c0, %c0_1] : memref<128x128xf32, #tpu.memory_space<vmem>>, vector<128x128xf32>
    %c0_2 = arith.constant 0 : index
    %c0_3 = arith.constant 0 : index
    %c0_4 = arith.constant 0 : index
    %4 = vector.load %arg6[%c0_2, %c0_3, %c0_4] : memref<1x128x128xf32, #tpu.memory_space<vmem>>, vector<1x128x128xf32>
    %5 = vector.shape_cast %4 : vector<1x128x128xf32> to vector<128x128xf32>
    %cst = arith.constant dense<0.000000e+00> : vector<128x128xf32>
    %6 = tpu.matmul %3, %5, %cst {dimension_numbers = #tpu.dot_dimension_numbers<[1], [0], [0], [1], [0, 0, 1, 1], [], []>} : vector<128x128xf32>, vector<128x128xf32>, vector<128x128xf32> -> vector<128x128xf32>
    %c0_5 = arith.constant 0 : index
    %c0_6 = arith.constant 0 : index
    %7 = vector.load %arg4[%c0_5, %c0_6] : memref<128x128xbf16, #tpu.memory_space<vmem>>, vector<128x128xbf16>
    %8 = arith.truncf %6 : vector<128x128xf32> to vector<128x128xbf16>
    %cst_7 = arith.constant dense<0.000000e+00> : vector<128x128xf32>
    %9 = tpu.matmul %7, %8, %cst_7 {dimension_numbers = #tpu.dot_dimension_numbers<[1], [0], [0], [1], [0, 0, 1, 1], [], []>} : vector<128x128xbf16>, vector<128x128xbf16>, vector<128x128xf32> -> vector<128x128xf32>
    %c0_8 = arith.constant 0 : index
    %c0_9 = arith.constant 0 : index
    %c0_10 = arith.constant 0 : index
    %10 = vector.load %arg7[%c0_8, %c0_9, %c0_10] : memref<1x1x128xf32, #tpu.memory_space<vmem>>, vector<1x1x128xf32>
    %11 = vector.shape_cast %10 : vector<1x1x128xf32> to vector<1x128xf32>
    %12 = vector.broadcast %11 : vector<1x128xf32> to vector<128x128xf32>
    %13 = arith.addf %9, %12 : vector<128x128xf32>
    %c0_11 = arith.constant 0 : index
    %c0_12 = arith.constant 0 : index
    %14 = vector.load %arg9[%c0_11, %c0_12] : memref<128x128xf32, #tpu.memory_space<vmem>>, vector<128x128xf32>
    tpu.vector_store %arg9[%c0_11, %c0_12], %13 {strides = array<i32>} : memref<128x128xf32, #tpu.memory_space<vmem>>, vector<128x128xf32>,
    %15 = arith.index_cast %arg0 : i32 to index
    %16 = memref.load %arg1[%15] : memref<10xi32, #tpu.memory_space<smem>>
    %c1_i32 = arith.constant 1 : i32
    %17 = arith.cmpi eq, %16, %c1_i32 : i32
    %18 = arith.extui %17 : i1 to i32
    %c0_i32_13 = arith.constant 0 : i32
    %19 = arith.cmpi ne, %18, %c0_i32_13 : i32
    scf.if %19 {
      %c0_19 = arith.constant 0 : index
      %c0_20 = arith.constant 0 : index
      %33 = vector.load %arg9[%c0_19, %c0_20] : memref<128x128xf32, #tpu.memory_space<vmem>>, vector<128x128xf32>
      %cst_21 = arith.constant 0.000000e+00 : f32
      %34 = vector.broadcast %cst_21 : f32 to vector<128x128xf32>
      %35 = arith.maximumf %33, %34 : vector<128x128xf32>
      %c0_22 = arith.constant 0 : index
      %c0_23 = arith.constant 0 : index
      %36 = vector.load %arg9[%c0_22, %c0_23] : memref<128x128xf32, #tpu.memory_space<vmem>>, vector<128x128xf32>
      tpu.vector_store %arg9[%c0_22, %c0_23], %35 {strides = array<i32>} : memref<128x128xf32, #tpu.memory_space<vmem>>, vector<128x128xf32>,
    } else {
    }
    %20 = arith.index_cast %arg0 : i32 to index
    %21 = memref.load %arg2[%20] : memref<10xi32, #tpu.memory_space<smem>>
    %c1_i32_14 = arith.constant 1 : i32
    %22 = arith.cmpi eq, %21, %c1_i32_14 : i32
    %23 = arith.extui %22 : i1 to i32
    %c0_i32_15 = arith.constant 0 : i32
    %24 = arith.cmpi ne, %23, %c0_i32_15 : i32
    scf.if %24 {
      %c0_19 = arith.constant 0 : index
      %c0_20 = arith.constant 0 : index
      %33 = vector.load %arg9[%c0_19, %c0_20] : memref<128x128xf32, #tpu.memory_space<vmem>>, vector<128x128xf32>
      %c0_21 = arith.constant 0 : index
      %c0_22 = arith.constant 0 : index
      %34 = vector.load %arg10[%c0_21, %c0_22] : memref<128x128xf32, #tpu.memory_space<vmem>>, vector<128x128xf32>
      tpu.vector_store %arg10[%c0_21, %c0_22], %33 {strides = array<i32>} : memref<128x128xf32, #tpu.memory_space<vmem>>, vector<128x128xf32>,
    } else {
    }
    %25 = arith.index_cast %arg0 : i32 to index
    %26 = memref.load %arg3[%25] : memref<10xi32, #tpu.memory_space<smem>>
    %c1_i32_16 = arith.constant 1 : i32
    %27 = arith.cmpi eq, %26, %c1_i32_16 : i32
    %28 = arith.extui %27 : i1 to i32
    %c0_i32_17 = arith.constant 0 : i32
    %29 = arith.cmpi ne, %28, %c0_i32_17 : i32
    scf.if %29 {
      %c0_19 = arith.constant 0 : index
      %c0_20 = arith.constant 0 : index
      %33 = vector.load %arg9[%c0_19, %c0_20] : memref<128x128xf32, #tpu.memory_space<vmem>>, vector<128x128xf32>
      %c0_21 = arith.constant 0 : index
      %c0_22 = arith.constant 0 : index
      %34 = vector.load %arg10[%c0_21, %c0_22] : memref<128x128xf32, #tpu.memory_space<vmem>>, vector<128x128xf32>
      %35 = arith.addf %33, %34 : vector<128x128xf32>
      %cst_23 = arith.constant 0.000000e+00 : f32
      %36 = vector.broadcast %cst_23 : f32 to vector<128x128xf32>
      %37 = arith.maximumf %35, %36 : vector<128x128xf32>
      %c0_24 = arith.constant 0 : index
      %c0_25 = arith.constant 0 : index
      %38 = vector.load %arg9[%c0_24, %c0_25] : memref<128x128xf32, #tpu.memory_space<vmem>>, vector<128x128xf32>
      tpu.vector_store %arg9[%c0_24, %c0_25], %37 {strides = array<i32>} : memref<128x128xf32, #tpu.memory_space<vmem>>, vector<128x128xf32>,
    } else {
    }
    %c9_i32 = arith.constant 9 : i32
    %30 = arith.cmpi eq, %arg0, %c9_i32 : i32
    %31 = arith.extui %30 : i1 to i32
    %c0_i32_18 = arith.constant 0 : i32
    %32 = arith.cmpi ne, %31, %c0_i32_18 : i32
    scf.if %32 {
      %c0_19 = arith.constant 0 : index
      %c0_20 = arith.constant 0 : index
      %33 = vector.load %arg9[%c0_19, %c0_20] : memref<128x128xf32, #tpu.memory_space<vmem>>, vector<128x128xf32>
      %c0_21 = arith.constant 0 : index
      %c0_22 = arith.constant 0 : index
      %34 = vector.load %arg8[%c0_21, %c0_22] : memref<128x128xf32, #tpu.memory_space<vmem>>, vector<128x128xf32>
      tpu.vector_store %arg8[%c0_21, %c0_22], %33 {strides = array<i32>} : memref<128x128xf32, #tpu.memory_space<vmem>>, vector<128x128xf32>,
    } else {
    }
    return
  }
  func.func @transform_0(%arg0: i32, %arg1: memref<10xi32, #tpu.memory_space<smem>>, %arg2: memref<10xi32, #tpu.memory_space<smem>>, %arg3: memref<10xi32, #tpu.memory_space<smem>>) -> (i32, i32) {
    %c0_i32 = arith.constant 0 : i32
    %c0_i32_0 = arith.constant 0 : i32
    %c0_i32_1 = arith.constant 0 : i32
    return %c0_i32, %c0_i32_0 : i32, i32
  }
  func.func @transform_1(%arg0: i32, %arg1: memref<10xi32, #tpu.memory_space<smem>>, %arg2: memref<10xi32, #tpu.memory_space<smem>>, %arg3: memref<10xi32, #tpu.memory_space<smem>>) -> (i32, i32) {
    %c0_i32 = arith.constant 0 : i32
    %c0_i32_0 = arith.constant 0 : i32
    %c0_i32_1 = arith.constant 0 : i32
    return %c0_i32, %c0_i32_0 : i32, i32
  }
  func.func @transform_2(%arg0: i32, %arg1: memref<10xi32, #tpu.memory_space<smem>>, %arg2: memref<10xi32, #tpu.memory_space<smem>>, %arg3: memref<10xi32, #tpu.memory_space<smem>>) -> (i32, i32, i32) {
    %c0_i32 = arith.constant 0 : i32
    %c0_i32_0 = arith.constant 0 : i32
    %c0_i32_1 = arith.constant 0 : i32
    return %arg0, %c0_i32, %c0_i32_0 : i32, i32, i32
  }
  func.func @transform_3(%arg0: i32, %arg1: memref<10xi32, #tpu.memory_space<smem>>, %arg2: memref<10xi32, #tpu.memory_space<smem>>, %arg3: memref<10xi32, #tpu.memory_space<smem>>) -> (i32, i32, i32) {
    %c0_i32 = arith.constant 0 : i32
    %c0_i32_0 = arith.constant 0 : i32
    %c0_i32_1 = arith.constant 0 : i32
    return %arg0, %c0_i32, %c0_i32_0 : i32, i32, i32
  }
  func.func @transform_4(%arg0: i32, %arg1: memref<10xi32, #tpu.memory_space<smem>>, %arg2: memref<10xi32, #tpu.memory_space<smem>>, %arg3: memref<10xi32, #tpu.memory_space<smem>>) -> (i32, i32) {
    %c0_i32 = arith.constant 0 : i32
    %c0_i32_0 = arith.constant 0 : i32
    %c0_i32_1 = arith.constant 0 : i32
    return %c0_i32, %c0_i32_0 : i32, i32
  }
}

</mosaic_0001>

<llo_original>
// kernel: parc_reduced_forward.16
$region0: #{parc_reduced_forward.16}
  #allocation0 [shape = 'u32[]', space=smem, size = 0x4, offset = 0x4, fixed_abs, tag = 'smem constant byte address 0x4 - core index']
  #allocation1 [shape = 'u32[144,128]{1,0:T(1,128)}', space=vmem, size = 0x12000, scoped, tag = 'internal scratch']
  #allocation2 [shape = 'f32[128,128]{1,0:T(8,128)}', space=vmem, size = 0x10000, scoped, tag = 'scratch operand']
  %s0 = inlined_call_operand.vmem [shape: bf16[128,128], index: 0, kind: input, shape index: {}, may-alias: {0,1}]
  %s1 = inlined_call_operand.vmem [shape: bf16[128,128], index: 1, kind: input, shape index: {}, may-alias: {0,1}]
  %s2 = inlined_call_operand.vmem [shape: f32[128,128], index: 2, kind: output, shape index: {}]
  %s3 = sld [smem:[#allocation0]]
  $region26: #{parc_reduced_forward.16} parent=0
    _
  %s5 = ssub.s32 1, %s3
  %s6 = scalar_select 0, %s5, %s3
  // Predicated region
  $region2: #{parc_reduced_forward.16} parent=0 // pred_check
    _
  $region3: #{parc_reduced_forward.16} parent=0 // pred_check_branch
    %8 = sbr.rel (0) target = $region5
  $region4: #{parc_reduced_forward.16} parent=0 // pred_region
    _
  $region5: #{parc_reduced_forward.16} parent=0 // pred_fallthru
    _
  // Predicated region
  $region6: #{parc_reduced_forward.16} parent=0 // pred_check
    _
  $region7: #{parc_reduced_forward.16} parent=0 // pred_check_branch
    %10 = sbr.rel (0) target = $region9
  $region8: #{parc_reduced_forward.16} parent=0 // pred_region
    _
  $region9: #{parc_reduced_forward.16} parent=0 // pred_fallthru
    _
  %p12 = scmp.eq.s32.totalorder 0, 0
  // Predicated region
  $region10: #{parc_reduced_forward.16} parent=0 // pred_check
    %p13 = pneg %p12
  $region11: #{parc_reduced_forward.16} parent=0 // pred_check_branch
    %15 = sbr.rel (%p13) target = $region13
  $region12: #{parc_reduced_forward.16} parent=0 // pred_region
    %16 = vst [vmem:[#allocation2] sm:$0xff] 0.0
    %17 = vst [vmem:[#allocation2 + $0x8] sm:$0xff] 0.0
    %18 = vst [vmem:[#allocation2 + $0x10] sm:$0xff] 0.0
    %19 = vst [vmem:[#allocation2 + $0x18] sm:$0xff] 0.0
    %20 = vst [vmem:[#allocation2 + $0x20] sm:$0xff] 0.0
    %21 = vst [vmem:[#allocation2 + $0x28] sm:$0xff] 0.0
    %22 = vst [vmem:[#allocation2 + $0x30] sm:$0xff] 0.0
    %23 = vst [vmem:[#allocation2 + $0x38] sm:$0xff] 0.0
    %24 = vst [vmem:[#allocation2 + $0x40] sm:$0xff] 0.0
    %25 = vst [vmem:[#allocation2 + $0x48] sm:$0xff] 0.0
    %26 = vst [vmem:[#allocation2 + $0x50] sm:$0xff] 0.0
    %27 = vst [vmem:[#allocation2 + $0x58] sm:$0xff] 0.0
    %28 = vst [vmem:[#allocation2 + $0x60] sm:$0xff] 0.0
    %29 = vst [vmem:[#allocation2 + $0x68] sm:$0xff] 0.0
    %30 = vst [vmem:[#allocation2 + $0x70] sm:$0xff] 0.0
    %31 = vst [vmem:[#allocation2 + $0x78] sm:$0xff] 0.0
  $region13: #{parc_reduced_forward.16} parent=0 // pred_fallthru
    _
  %v32 = vld [vmem:[#allocation2] sm:$0xff]
  %v33 = vld [vmem:[#allocation2 + $0x8] sm:$0xff]
  %v34 = vld [vmem:[#allocation2 + $0x10] sm:$0xff]
  %v35 = vld [vmem:[#allocation2 + $0x18] sm:$0xff]
  %v36 = vld [vmem:[#allocation2 + $0x20] sm:$0xff]
  %v37 = vld [vmem:[#allocation2 + $0x28] sm:$0xff]
  %v38 = vld [vmem:[#allocation2 + $0x30] sm:$0xff]
  %v39 = vld [vmem:[#allocation2 + $0x38] sm:$0xff]
  %v40 = vld [vmem:[#allocation2 + $0x40] sm:$0xff]
  %v41 = vld [vmem:[#allocation2 + $0x48] sm:$0xff]
  %v42 = vld [vmem:[#allocation2 + $0x50] sm:$0xff]
  %v43 = vld [vmem:[#allocation2 + $0x58] sm:$0xff]
  %v44 = vld [vmem:[#allocation2 + $0x60] sm:$0xff]
  %v45 = vld [vmem:[#allocation2 + $0x68] sm:$0xff]
  %v46 = vld [vmem:[#allocation2 + $0x70] sm:$0xff]
  %v47 = vld [vmem:[#allocation2 + $0x78] sm:$0xff]
  %v48 = vld [vmem:[%s0] sm:$0xf]
  %v49 = vld [vmem:[%s0 + $0x4] sm:$0xf]
  %v50 = vld [vmem:[%s0 + $0x8] sm:$0xf]
  %v51 = vld [vmem:[%s0 + $0xc] sm:$0xf]
  %v52 = vld [vmem:[%s0 + $0x10] sm:$0xf]
  %v53 = vld [vmem:[%s0 + $0x14] sm:$0xf]
  %v54 = vld [vmem:[%s0 + $0x18] sm:$0xf]
  %v55 = vld [vmem:[%s0 + $0x1c] sm:$0xf]
  %v56 = vld [vmem:[%s0 + $0x20] sm:$0xf]
  %v57 = vld [vmem:[%s0 + $0x24] sm:$0xf]
  %v58 = vld [vmem:[%s0 + $0x28] sm:$0xf]
  %v59 = vld [vmem:[%s0 + $0x2c] sm:$0xf]
  %v60 = vld [vmem:[%s0 + $0x30] sm:$0xf]
  %v61 = vld [vmem:[%s0 + $0x34] sm:$0xf]
  %v62 = vld [vmem:[%s0 + $0x38] sm:$0xf]
  %v63 = vld [vmem:[%s0 + $0x3c] sm:$0xf]
  %v64 = vld [vmem:[%s1] sm:$0xf]
  %v65 = vld [vmem:[%s1 + $0x4] sm:$0xf]
  %v66 = vld [vmem:[%s1 + $0x8] sm:$0xf]
  %v67 = vld [vmem:[%s1 + $0xc] sm:$0xf]
  %v68 = vld [vmem:[%s1 + $0x10] sm:$0xf]
  %v69 = vld [vmem:[%s1 + $0x14] sm:$0xf]
  %v70 = vld [vmem:[%s1 + $0x18] sm:$0xf]
  %v71 = vld [vmem:[%s1 + $0x1c] sm:$0xf]
  %v72 = vld [vmem:[%s1 + $0x20] sm:$0xf]
  %v73 = vld [vmem:[%s1 + $0x24] sm:$0xf]
  %v74 = vld [vmem:[%s1 + $0x28] sm:$0xf]
  %v75 = vld [vmem:[%s1 + $0x2c] sm:$0xf]
  %v76 = vld [vmem:[%s1 + $0x30] sm:$0xf]
  %v77 = vld [vmem:[%s1 + $0x34] sm:$0xf]
  %v78 = vld [vmem:[%s1 + $0x38] sm:$0xf]
  %v79 = vld [vmem:[%s1 + $0x3c] sm:$0xf]
  %v96 = vunpack.c.l.b16 %v48
  %v97 = vunpack.c.l.b16 %v49
  %v98 = vunpack.c.l.b16 %v50
  %v99 = vunpack.c.l.b16 %v51
  %v100 = vunpack.c.l.b16 %v52
  %v101 = vunpack.c.l.b16 %v53
  %v102 = vunpack.c.l.b16 %v54
  %v103 = vunpack.c.l.b16 %v55
  %v104 = vunpack.c.l.b16 %v56
  %v105 = vunpack.c.l.b16 %v57
  %v106 = vunpack.c.l.b16 %v58
  %v107 = vunpack.c.l.b16 %v59
  %v108 = vunpack.c.l.b16 %v60
  %v109 = vunpack.c.l.b16 %v61
  %v110 = vunpack.c.l.b16 %v62
  %v111 = vunpack.c.l.b16 %v63
  %v112 = vpack.c.b16 %v97, %v96
  %v113 = vpack.c.b16 %v99, %v98
  %v114 = vpack.c.b16 %v101, %v100
  %v115 = vpack.c.b16 %v103, %v102
  %v116 = vpack.c.b16 %v105, %v104
  %v117 = vpack.c.b16 %v107, %v106
  %v118 = vpack.c.b16 %v109, %v108
  %v119 = vpack.c.b16 %v111, %v110
  %v144 = vunpack.c.l.b16 %v64
  %v145 = vunpack.c.l.b16 %v65
  %v146 = vunpack.c.l.b16 %v66
  %v147 = vunpack.c.l.b16 %v67
  %v148 = vunpack.c.l.b16 %v68
  %v149 = vunpack.c.l.b16 %v69
  %v150 = vunpack.c.l.b16 %v70
  %v151 = vunpack.c.l.b16 %v71
  %v152 = vunpack.c.l.b16 %v72
  %v153 = vunpack.c.l.b16 %v73
  %v154 = vunpack.c.l.b16 %v74
  %v155 = vunpack.c.l.b16 %v75
  %v156 = vunpack.c.l.b16 %v76
  %v157 = vunpack.c.l.b16 %v77
  %v158 = vunpack.c.l.b16 %v78
  %v159 = vunpack.c.l.b16 %v79
  %v160 = vpack.c.b16 %v145, %v144
  %v161 = vpack.c.b16 %v147, %v146
  %v162 = vpack.c.b16 %v149, %v148
  %v163 = vpack.c.b16 %v151, %v150
  %v164 = vpack.c.b16 %v153, %v152
  %v165 = vpack.c.b16 %v155, %v154
  %v166 = vpack.c.b16 %v157, %v156
  %v167 = vpack.c.b16 %v159, %v158
  %176 = vmatprep.subr.bf16.mxu0 0
  %177 = vmatpush1.bf16.msra.mxu0 %v160
  %178 = vmatprep.subr.bf16.mxu0 0
  %179 = vmatpush1.bf16.msra.mxu0 %v161
  %180 = vmatprep.subr.bf16.mxu0 0
  %181 = vmatpush1.bf16.msra.mxu0 %v162
  %182 = vmatprep.subr.bf16.mxu0 0
  %183 = vmatpush1.bf16.msra.mxu0 %v163
  %184 = vmatprep.subr.bf16.mxu0 0
  %185 = vmatpush1.bf16.msra.mxu0 %v164
  %186 = vmatprep.subr.bf16.mxu0 0
  %187 = vmatpush1.bf16.msra.mxu0 %v165
  %188 = vmatprep.subr.bf16.mxu0 0
  %189 = vmatpush1.bf16.msra.mxu0 %v166
  %190 = vmatprep.subr.bf16.mxu0 0
  %191 = vmatpush1.bf16.msra.mxu0 %v167
  %192 = vmatprep.subr.bf16.mxu0 0
  %193 = vmatpush1.bf16.msra.mxu0 0
  %194 = vmatprep.subr.bf16.mxu0 0
  %195 = vmatpush1.bf16.msra.mxu0 0
  %196 = vmatprep.subr.bf16.mxu0 0
  %197 = vmatpush1.bf16.msra.mxu0 0
  %198 = vmatprep.subr.bf16.mxu0 0
  %199 = vmatpush1.bf16.msra.mxu0 0
  %200 = vmatprep.subr.bf16.mxu0 0
  %201 = vmatpush1.bf16.msra.mxu0 0
  %202 = vmatprep.subr.bf16.mxu0 0
  %203 = vmatpush1.bf16.msra.mxu0 0
  %204 = vmatprep.subr.bf16.mxu0 0
  %205 = vmatpush1.bf16.msra.mxu0 0
  %206 = vmatprep.subr.bf16.mxu0 0
  %207 = vmatpush1.bf16.msra.mxu0 0
  %208 = vmatprep.mubr.bf16.mxu0 0
  %209 = vmatmul.mubr.bf16.gmra.mrb[0].mxu0 %v112
  %v210 = vpop.f32.mrb[0].mxu0
  %v211 = vadd.f32 0.0, %v210
  %v212 = vpop.f32.mrb[0].mxu0
  %v213 = vpop.f32.mrb[0].mxu0
  %v214 = vadd.f32 0.0, %v213
  %v215 = vpop.f32.mrb[0].mxu0
  %216 = vmatprep.mubr.bf16.mxu0 0
  %217 = vmatmul.mubr.bf16.gmra.mrb[0].mxu0 %v113
  %v218 = vpop.f32.mrb[0].mxu0
  %v219 = vadd.f32 0.0, %v218
  %v220 = vpop.f32.mrb[0].mxu0
  %v221 = vpop.f32.mrb[0].mxu0
  %v222 = vadd.f32 0.0, %v221
  %v223 = vpop.f32.mrb[0].mxu0
  %224 = vmatprep.mubr.bf16.mxu0 0
  %225 = vmatmul.mubr.bf16.gmra.mrb[0].mxu0 %v114
  %v226 = vpop.f32.mrb[0].mxu0
  %v227 = vadd.f32 0.0, %v226
  %v228 = vpop.f32.mrb[0].mxu0
  %v229 = vpop.f32.mrb[0].mxu0
  %v230 = vadd.f32 0.0, %v229
  %v231 = vpop.f32.mrb[0].mxu0
  %232 = vmatprep.mubr.bf16.mxu0 0
  %233 = vmatmul.mubr.bf16.gmra.mrb[0].mxu0 %v115
  %v234 = vpop.f32.mrb[0].mxu0
  %v235 = vadd.f32 0.0, %v234
  %v236 = vpop.f32.mrb[0].mxu0
  %v237 = vpop.f32.mrb[0].mxu0
  %v238 = vadd.f32 0.0, %v237
  %v239 = vpop.f32.mrb[0].mxu0
  %240 = vmatprep.mubr.bf16.mxu0 0
  %241 = vmatmul.mubr.bf16.gmra.mrb[0].mxu0 %v116
  %v242 = vpop.f32.mrb[0].mxu0
  %v243 = vadd.f32 0.0, %v242
  %v244 = vpop.f32.mrb[0].mxu0
  %v245 = vpop.f32.mrb[0].mxu0
  %v246 = vadd.f32 0.0, %v245
  %v247 = vpop.f32.mrb[0].mxu0
  %248 = vmatprep.mubr.bf16.mxu0 0
  %249 = vmatmul.mubr.bf16.gmra.mrb[0].mxu0 %v117
  %v250 = vpop.f32.mrb[0].mxu0
  %v251 = vadd.f32 0.0, %v250
  %v252 = vpop.f32.mrb[0].mxu0
  %v253 = vpop.f32.mrb[0].mxu0
  %v254 = vadd.f32 0.0, %v253
  %v255 = vpop.f32.mrb[0].mxu0
  %256 = vmatprep.mubr.bf16.mxu0 0
  %257 = vmatmul.mubr.bf16.gmra.mrb[0].mxu0 %v118
  %v258 = vpop.f32.mrb[0].mxu0
  %v259 = vadd.f32 0.0, %v258
  %v260 = vpop.f32.mrb[0].mxu0
  %v261 = vpop.f32.mrb[0].mxu0
  %v262 = vadd.f32 0.0, %v261
  %v263 = vpop.f32.mrb[0].mxu0
  %264 = vmatprep.mubr.bf16.mxu0 0
  %265 = vmatmul.mubr.bf16.gmra.mrb[0].mxu0 %v119
  %v266 = vpop.f32.mrb[0].mxu0
  %v267 = vadd.f32 0.0, %v266
  %v268 = vpop.f32.mrb[0].mxu0
  %v269 = vpop.f32.mrb[0].mxu0
  %v270 = vadd.f32 0.0, %v269
  %v271 = vpop.f32.mrb[0].mxu0
  %272 = vdwg.mxu0
  %v273 = vadd.f32 %v32, %v211
  %v274 = vadd.f32 %v33, %v214
  %v275 = vadd.f32 %v34, %v219
  %v276 = vadd.f32 %v35, %v222
  %v277 = vadd.f32 %v36, %v227
  %v278 = vadd.f32 %v37, %v230
  %v279 = vadd.f32 %v38, %v235
  %v280 = vadd.f32 %v39, %v238
  %v281 = vadd.f32 %v40, %v243
  %v282 = vadd.f32 %v41, %v246
  %v283 = vadd.f32 %v42, %v251
  %v284 = vadd.f32 %v43, %v254
  %v285 = vadd.f32 %v44, %v259
  %v286 = vadd.f32 %v45, %v262
  %v287 = vadd.f32 %v46, %v267
  %v288 = vadd.f32 %v47, %v270
  %289 = vst [vmem:[#allocation2] sm:$0xff] %v273
  %290 = vst [vmem:[#allocation2 + $0x8] sm:$0xff] %v274
  %291 = vst [vmem:[#allocation2 + $0x10] sm:$0xff] %v275
  %292 = vst [vmem:[#allocation2 + $0x18] sm:$0xff] %v276
  %293 = vst [vmem:[#allocation2 + $0x20] sm:$0xff] %v277
  %294 = vst [vmem:[#allocation2 + $0x28] sm:$0xff] %v278
  %295 = vst [vmem:[#allocation2 + $0x30] sm:$0xff] %v279
  %296 = vst [vmem:[#allocation2 + $0x38] sm:$0xff] %v280
  %297 = vst [vmem:[#allocation2 + $0x40] sm:$0xff] %v281
  %298 = vst [vmem:[#allocation2 + $0x48] sm:$0xff] %v282
  %299 = vst [vmem:[#allocation2 + $0x50] sm:$0xff] %v283
  %300 = vst [vmem:[#allocation2 + $0x58] sm:$0xff] %v284
  %301 = vst [vmem:[#allocation2 + $0x60] sm:$0xff] %v285
  %302 = vst [vmem:[#allocation2 + $0x68] sm:$0xff] %v286
  %303 = vst [vmem:[#allocation2 + $0x70] sm:$0xff] %v287
  %304 = vst [vmem:[#allocation2 + $0x78] sm:$0xff] %v288
  // Predicated region
  $region14: #{parc_reduced_forward.16} parent=0 // pred_check
    %p305 = pneg %p12
  $region15: #{parc_reduced_forward.16} parent=0 // pred_check_branch
    %307 = sbr.rel (%p305) target = $region17
  $region16: #{parc_reduced_forward.16} parent=0 // pred_region
    %v308 = vld [vmem:[#allocation2] sm:$0xff]
    %v309 = vld [vmem:[#allocation2 + $0x8] sm:$0xff]
    %v310 = vld [vmem:[#allocation2 + $0x10] sm:$0xff]
    %v311 = vld [vmem:[#allocation2 + $0x18] sm:$0xff]
    %v312 = vld [vmem:[#allocation2 + $0x20] sm:$0xff]
    %v313 = vld [vmem:[#allocation2 + $0x28] sm:$0xff]
    %v314 = vld [vmem:[#allocation2 + $0x30] sm:$0xff]
    %v315 = vld [vmem:[#allocation2 + $0x38] sm:$0xff]
    %v316 = vld [vmem:[#allocation2 + $0x40] sm:$0xff]
    %v317 = vld [vmem:[#allocation2 + $0x48] sm:$0xff]
    %v318 = vld [vmem:[#allocation2 + $0x50] sm:$0xff]
    %v319 = vld [vmem:[#allocation2 + $0x58] sm:$0xff]
    %v320 = vld [vmem:[#allocation2 + $0x60] sm:$0xff]
    %v321 = vld [vmem:[#allocation2 + $0x68] sm:$0xff]
    %v322 = vld [vmem:[#allocation2 + $0x70] sm:$0xff]
    %v323 = vld [vmem:[#allocation2 + $0x78] sm:$0xff]
    %v324 = vlaneseq
    %v325 = vshrl.u32 %v324, 7
    %v326 = vadd.s32 %v325, 8
    %v327 = vadd.s32 %v325, 16
    %v328 = vadd.s32 %v325, 24
    %v329 = vadd.s32 %v325, 32
    %v330 = vadd.s32 %v325, 40
    %v331 = vadd.s32 %v325, 48
    %v332 = vadd.s32 %v325, 56
    %v333 = vadd.s32 %v325, 64
    %v334 = vadd.s32 %v325, 72
    %v335 = vadd.s32 %v325, 80
    %v336 = vadd.s32 %v325, 88
    %v337 = vadd.s32 %v325, 96
    %v338 = vadd.s32 %v325, 104
    %v339 = vadd.s32 %v325, 112
    %v340 = vadd.s32 %v325, 120
    %s341 = smul.u32 0, 128
    %v342 = vstv %s341
    %v343 = vadd.s32 %v325, %v342
    %v344 = vadd.s32 %v326, %v342
    %v345 = vadd.s32 %v327, %v342
    %v346 = vadd.s32 %v328, %v342
    %v347 = vadd.s32 %v329, %v342
    %v348 = vadd.s32 %v330, %v342
    %v349 = vadd.s32 %v331, %v342
    %v350 = vadd.s32 %v332, %v342
    %v351 = vadd.s32 %v333, %v342
    %v352 = vadd.s32 %v334, %v342
    %v353 = vadd.s32 %v335, %v342
    %v354 = vadd.s32 %v336, %v342
    %v355 = vadd.s32 %v337, %v342
    %v356 = vadd.s32 %v338, %v342
    %v357 = vadd.s32 %v339, %v342
    %v358 = vadd.s32 %v340, %v342
    %v359 = vlaneseq
    %v360 = vand.u32 %v359, 127
    %s361 = smul.u32 0, 128
    %v362 = vstv %s361
    %v363 = vadd.s32 %v360, %v362
    %vm364 = vcmp.eq.s32.totalorder %v343, %v363
    %vm365 = vcmp.eq.s32.totalorder %v344, %v363
    %vm366 = vcmp.eq.s32.totalorder %v345, %v363
    %vm367 = vcmp.eq.s32.totalorder %v346, %v363
    %vm368 = vcmp.eq.s32.totalorder %v347, %v363
    %vm369 = vcmp.eq.s32.totalorder %v348, %v363
    %vm370 = vcmp.eq.s32.totalorder %v349, %v363
    %vm371 = vcmp.eq.s32.totalorder %v350, %v363
    %vm372 = vcmp.eq.s32.totalorder %v351, %v363
    %vm373 = vcmp.eq.s32.totalorder %v352, %v363
    %vm374 = vcmp.eq.s32.totalorder %v353, %v363
    %vm375 = vcmp.eq.s32.totalorder %v354, %v363
    %vm376 = vcmp.eq.s32.totalorder %v355, %v363
    %vm377 = vcmp.eq.s32.totalorder %v356, %v363
    %vm378 = vcmp.eq.s32.totalorder %v357, %v363
    %vm379 = vcmp.eq.s32.totalorder %v358, %v363
    %v380 = vsel %vm364, 0.0, %v308
    %v381 = vsel %vm365, 0.0, %v309
    %v382 = vsel %vm366, 0.0, %v310
    %v383 = vsel %vm367, 0.0, %v311
    %v384 = vsel %vm368, 0.0, %v312
    %v385 = vsel %vm369, 0.0, %v313
    %v386 = vsel %vm370, 0.0, %v314
    %v387 = vsel %vm371, 0.0, %v315
    %v388 = vsel %vm372, 0.0, %v316
    %v389 = vsel %vm373, 0.0, %v317
    %v390 = vsel %vm374, 0.0, %v318
    %v391 = vsel %vm375, 0.0, %v319
    %v392 = vsel %vm376, 0.0, %v320
    %v393 = vsel %vm377, 0.0, %v321
    %v394 = vsel %vm378, 0.0, %v322
    %v395 = vsel %vm379, 0.0, %v323
    %396 = vst [vmem:[%s2] sm:$0xff] %v380
    %397 = vst [vmem:[%s2 + $0x8] sm:$0xff] %v381
    %398 = vst [vmem:[%s2 + $0x10] sm:$0xff] %v382
    %399 = vst [vmem:[%s2 + $0x18] sm:$0xff] %v383
    %400 = vst [vmem:[%s2 + $0x20] sm:$0xff] %v384
    %401 = vst [vmem:[%s2 + $0x28] sm:$0xff] %v385
    %402 = vst [vmem:[%s2 + $0x30] sm:$0xff] %v386
    %403 = vst [vmem:[%s2 + $0x38] sm:$0xff] %v387
    %404 = vst [vmem:[%s2 + $0x40] sm:$0xff] %v388
    %405 = vst [vmem:[%s2 + $0x48] sm:$0xff] %v389
    %406 = vst [vmem:[%s2 + $0x50] sm:$0xff] %v390
    %407 = vst [vmem:[%s2 + $0x58] sm:$0xff] %v391
    %408 = vst [vmem:[%s2 + $0x60] sm:$0xff] %v392
    %409 = vst [vmem:[%s2 + $0x68] sm:$0xff] %v393
    %410 = vst [vmem:[%s2 + $0x70] sm:$0xff] %v394
    %411 = vst [vmem:[%s2 + $0x78] sm:$0xff] %v395
  $region17: #{parc_reduced_forward.16} parent=0 // pred_fallthru
    _
  // Predicated region
  $region18: #{parc_reduced_forward.16} parent=0 // pred_check
    _
  $region19: #{parc_reduced_forward.16} parent=0 // pred_check_branch
    %413 = sbr.rel (0) target = $region21
  $region20: #{parc_reduced_forward.16} parent=0 // pred_region
    _
  $region21: #{parc_reduced_forward.16} parent=0 // pred_fallthru
    _
  // Predicated region
  $region22: #{parc_reduced_forward.16} parent=0 // pred_check
    _
  $region23: #{parc_reduced_forward.16} parent=0 // pred_check_branch
    %415 = sbr.rel (0) target = $region25
  $region24: #{parc_reduced_forward.16} parent=0 // pred_region
    _
  $region25: #{parc_reduced_forward.16} parent=0 // pred_fallthru
    _

// kernel: parc_reduced_forward.11
$region0: #{parc_reduced_forward.11}
  #allocation0 [shape = 'u32[]', space=smem, size = 0x4, offset = 0x4, fixed_abs, tag = 'smem constant byte address 0x4 - core index']
  #allocation1 [shape = 'u32[144,128]{1,0:T(1,128)}', space=vmem, size = 0x12000, scoped, tag = 'internal scratch']
  #allocation2 [shape = 'f32[128,128]{1,0:T(8,128)}', space=vmem, size = 0x10000, scoped, tag = 'scratch operand']
  %s0 = inlined_call_operand.vmem [shape: bf16[128,128], index: 0, kind: input, shape index: {}]
  %s1 = inlined_call_operand.vmem [shape: bf16[128,128], index: 1, kind: input, shape index: {}]
  %s2 = inlined_call_operand.vmem [shape: f32[1,128], index: 2, kind: input, shape index: {}]
  %s3 = inlined_call_operand.vmem [shape: f32[128,128], index: 3, kind: output, shape index: {}]
  %s4 = sld [smem:[#allocation0]]
  $region30: #{parc_reduced_forward.11} parent=0
    _
  %s6 = ssub.s32 1, %s4
  %s7 = scalar_select 0, %s6, %s4
  // Predicated region
  $region2: #{parc_reduced_forward.11} parent=0 // pred_check
    _
  $region3: #{parc_reduced_forward.11} parent=0 // pred_check_branch
    %9 = sbr.rel (0) target = $region5
  $region4: #{parc_reduced_forward.11} parent=0 // pred_region
    _
  $region5: #{parc_reduced_forward.11} parent=0 // pred_fallthru
    _
  // Predicated region
  $region6: #{parc_reduced_forward.11} parent=0 // pred_check
    _
  $region7: #{parc_reduced_forward.11} parent=0 // pred_check_branch
    %11 = sbr.rel (0) target = $region9
  $region8: #{parc_reduced_forward.11} parent=0 // pred_region
    _
  $region9: #{parc_reduced_forward.11} parent=0 // pred_fallthru
    _
  // Predicated region
  $region10: #{parc_reduced_forward.11} parent=0 // pred_check
    _
  $region11: #{parc_reduced_forward.11} parent=0 // pred_check_branch
    %13 = sbr.rel (0) target = $region13
  $region12: #{parc_reduced_forward.11} parent=0 // pred_region
    _
  $region13: #{parc_reduced_forward.11} parent=0 // pred_fallthru
    _
  %p15 = scmp.eq.s32.totalorder 0, 0
  // Predicated region
  $region14: #{parc_reduced_forward.11} parent=0 // pred_check
    %p16 = pneg %p15
  $region15: #{parc_reduced_forward.11} parent=0 // pred_check_branch
    %18 = sbr.rel (%p16) target = $region17
  $region16: #{parc_reduced_forward.11} parent=0 // pred_region
    %19 = vst [vmem:[#allocation2] sm:$0xff] 0.0
    %20 = vst [vmem:[#allocation2 + $0x8] sm:$0xff] 0.0
    %21 = vst [vmem:[#allocation2 + $0x10] sm:$0xff] 0.0
    %22 = vst [vmem:[#allocation2 + $0x18] sm:$0xff] 0.0
    %23 = vst [vmem:[#allocation2 + $0x20] sm:$0xff] 0.0
    %24 = vst [vmem:[#allocation2 + $0x28] sm:$0xff] 0.0
    %25 = vst [vmem:[#allocation2 + $0x30] sm:$0xff] 0.0
    %26 = vst [vmem:[#allocation2 + $0x38] sm:$0xff] 0.0
    %27 = vst [vmem:[#allocation2 + $0x40] sm:$0xff] 0.0
    %28 = vst [vmem:[#allocation2 + $0x48] sm:$0xff] 0.0
    %29 = vst [vmem:[#allocation2 + $0x50] sm:$0xff] 0.0
    %30 = vst [vmem:[#allocation2 + $0x58] sm:$0xff] 0.0
    %31 = vst [vmem:[#allocation2 + $0x60] sm:$0xff] 0.0
    %32 = vst [vmem:[#allocation2 + $0x68] sm:$0xff] 0.0
    %33 = vst [vmem:[#allocation2 + $0x70] sm:$0xff] 0.0
    %34 = vst [vmem:[#allocation2 + $0x78] sm:$0xff] 0.0
  $region17: #{parc_reduced_forward.11} parent=0 // pred_fallthru
    _
  %v35 = vld [vmem:[#allocation2] sm:$0xff]
  %v36 = vld [vmem:[#allocation2 + $0x8] sm:$0xff]
  %v37 = vld [vmem:[#allocation2 + $0x10] sm:$0xff]
  %v38 = vld [vmem:[#allocation2 + $0x18] sm:$0xff]
  %v39 = vld [vmem:[#allocation2 + $0x20] sm:$0xff]
  %v40 = vld [vmem:[#allocation2 + $0x28] sm:$0xff]
  %v41 = vld [vmem:[#allocation2 + $0x30] sm:$0xff]
  %v42 = vld [vmem:[#allocation2 + $0x38] sm:$0xff]
  %v43 = vld [vmem:[#allocation2 + $0x40] sm:$0xff]
  %v44 = vld [vmem:[#allocation2 + $0x48] sm:$0xff]
  %v45 = vld [vmem:[#allocation2 + $0x50] sm:$0xff]
  %v46 = vld [vmem:[#allocation2 + $0x58] sm:$0xff]
  %v47 = vld [vmem:[#allocation2 + $0x60] sm:$0xff]
  %v48 = vld [vmem:[#allocation2 + $0x68] sm:$0xff]
  %v49 = vld [vmem:[#allocation2 + $0x70] sm:$0xff]
  %v50 = vld [vmem:[#allocation2 + $0x78] sm:$0xff]
  %v51 = vld [vmem:[%s0] sm:$0xf]
  %v52 = vld [vmem:[%s0 + $0x4] sm:$0xf]
  %v53 = vld [vmem:[%s0 + $0x8] sm:$0xf]
  %v54 = vld [vmem:[%s0 + $0xc] sm:$0xf]
  %v55 = vld [vmem:[%s0 + $0x10] sm:$0xf]
  %v56 = vld [vmem:[%s0 + $0x14] sm:$0xf]
  %v57 = vld [vmem:[%s0 + $0x18] sm:$0xf]
  %v58 = vld [vmem:[%s0 + $0x1c] sm:$0xf]
  %v59 = vld [vmem:[%s0 + $0x20] sm:$0xf]
  %v60 = vld [vmem:[%s0 + $0x24] sm:$0xf]
  %v61 = vld [vmem:[%s0 + $0x28] sm:$0xf]
  %v62 = vld [vmem:[%s0 + $0x2c] sm:$0xf]
  %v63 = vld [vmem:[%s0 + $0x30] sm:$0xf]
  %v64 = vld [vmem:[%s0 + $0x34] sm:$0xf]
  %v65 = vld [vmem:[%s0 + $0x38] sm:$0xf]
  %v66 = vld [vmem:[%s0 + $0x3c] sm:$0xf]
  %v67 = vld [vmem:[%s1] sm:$0xf]
  %v68 = vld [vmem:[%s1 + $0x4] sm:$0xf]
  %v69 = vld [vmem:[%s1 + $0x8] sm:$0xf]
  %v70 = vld [vmem:[%s1 + $0xc] sm:$0xf]
  %v71 = vld [vmem:[%s1 + $0x10] sm:$0xf]
  %v72 = vld [vmem:[%s1 + $0x14] sm:$0xf]
  %v73 = vld [vmem:[%s1 + $0x18] sm:$0xf]
  %v74 = vld [vmem:[%s1 + $0x1c] sm:$0xf]
  %v75 = vld [vmem:[%s1 + $0x20] sm:$0xf]
  %v76 = vld [vmem:[%s1 + $0x24] sm:$0xf]
  %v77 = vld [vmem:[%s1 + $0x28] sm:$0xf]
  %v78 = vld [vmem:[%s1 + $0x2c] sm:$0xf]
  %v79 = vld [vmem:[%s1 + $0x30] sm:$0xf]
  %v80 = vld [vmem:[%s1 + $0x34] sm:$0xf]
  %v81 = vld [vmem:[%s1 + $0x38] sm:$0xf]
  %v82 = vld [vmem:[%s1 + $0x3c] sm:$0xf]
  %v99 = vunpack.c.l.b16 %v51
  %v100 = vunpack.c.l.b16 %v52
  %v101 = vunpack.c.l.b16 %v53
  %v102 = vunpack.c.l.b16 %v54
  %v103 = vunpack.c.l.b16 %v55
  %v104 = vunpack.c.l.b16 %v56
  %v105 = vunpack.c.l.b16 %v57
  %v106 = vunpack.c.l.b16 %v58
  %v107 = vunpack.c.l.b16 %v59
  %v108 = vunpack.c.l.b16 %v60
  %v109 = vunpack.c.l.b16 %v61
  %v110 = vunpack.c.l.b16 %v62
  %v111 = vunpack.c.l.b16 %v63
  %v112 = vunpack.c.l.b16 %v64
  %v113 = vunpack.c.l.b16 %v65
  %v114 = vunpack.c.l.b16 %v66
  %v115 = vpack.c.b16 %v100, %v99
  %v116 = vpack.c.b16 %v102, %v101
  %v117 = vpack.c.b16 %v104, %v103
  %v118 = vpack.c.b16 %v106, %v105
  %v119 = vpack.c.b16 %v108, %v107
  %v120 = vpack.c.b16 %v110, %v109
  %v121 = vpack.c.b16 %v112, %v111
  %v122 = vpack.c.b16 %v114, %v113
  %v147 = vunpack.c.l.b16 %v67
  %v148 = vunpack.c.l.b16 %v68
  %v149 = vunpack.c.l.b16 %v69
  %v150 = vunpack.c.l.b16 %v70
  %v151 = vunpack.c.l.b16 %v71
  %v152 = vunpack.c.l.b16 %v72
  %v153 = vunpack.c.l.b16 %v73
  %v154 = vunpack.c.l.b16 %v74
  %v155 = vunpack.c.l.b16 %v75
  %v156 = vunpack.c.l.b16 %v76
  %v157 = vunpack.c.l.b16 %v77
  %v158 = vunpack.c.l.b16 %v78
  %v159 = vunpack.c.l.b16 %v79
  %v160 = vunpack.c.l.b16 %v80
  %v161 = vunpack.c.l.b16 %v81
  %v162 = vunpack.c.l.b16 %v82
  %v163 = vpack.c.b16 %v148, %v147
  %v164 = vpack.c.b16 %v150, %v149
  %v165 = vpack.c.b16 %v152, %v151
  %v166 = vpack.c.b16 %v154, %v153
  %v167 = vpack.c.b16 %v156, %v155
  %v168 = vpack.c.b16 %v158, %v157
  %v169 = vpack.c.b16 %v160, %v159
  %v170 = vpack.c.b16 %v162, %v161
  %179 = vmatprep.subr.bf16.mxu0 0
  %180 = vmatpush1.bf16.msra.mxu0 %v163
  %181 = vmatprep.subr.bf16.mxu0 0
  %182 = vmatpush1.bf16.msra.mxu0 %v164
  %183 = vmatprep.subr.bf16.mxu0 0
  %184 = vmatpush1.bf16.msra.mxu0 %v165
  %185 = vmatprep.subr.bf16.mxu0 0
  %186 = vmatpush1.bf16.msra.mxu0 %v166
  %187 = vmatprep.subr.bf16.mxu0 0
  %188 = vmatpush1.bf16.msra.mxu0 %v167
  %189 = vmatprep.subr.bf16.mxu0 0
  %190 = vmatpush1.bf16.msra.mxu0 %v168
  %191 = vmatprep.subr.bf16.mxu0 0
  %192 = vmatpush1.bf16.msra.mxu0 %v169
  %193 = vmatprep.subr.bf16.mxu0 0
  %194 = vmatpush1.bf16.msra.mxu0 %v170
  %195 = vmatprep.subr.bf16.mxu0 0
  %196 = vmatpush1.bf16.msra.mxu0 0
  %197 = vmatprep.subr.bf16.mxu0 0
  %198 = vmatpush1.bf16.msra.mxu0 0
  %199 = vmatprep.subr.bf16.mxu0 0
  %200 = vmatpush1.bf16.msra.mxu0 0
  %201 = vmatprep.subr.bf16.mxu0 0
  %202 = vmatpush1.bf16.msra.mxu0 0
  %203 = vmatprep.subr.bf16.mxu0 0
  %204 = vmatpush1.bf16.msra.mxu0 0
  %205 = vmatprep.subr.bf16.mxu0 0
  %206 = vmatpush1.bf16.msra.mxu0 0
  %207 = vmatprep.subr.bf16.mxu0 0
  %208 = vmatpush1.bf16.msra.mxu0 0
  %209 = vmatprep.subr.bf16.mxu0 0
  %210 = vmatpush1.bf16.msra.mxu0 0
  %211 = vmatprep.mubr.bf16.mxu0 0
  %212 = vmatmul.mubr.bf16.gmra.mrb[0].mxu0 %v115
  %v213 = vpop.f32.mrb[0].mxu0
  %v214 = vadd.f32 0.0, %v213
  %v215 = vpop.f32.mrb[0].mxu0
  %v216 = vpop.f32.mrb[0].mxu0
  %v217 = vadd.f32 0.0, %v216
  %v218 = vpop.f32.mrb[0].mxu0
  %219 = vmatprep.mubr.bf16.mxu0 0
  %220 = vmatmul.mubr.bf16.gmra.mrb[0].mxu0 %v116
  %v221 = vpop.f32.mrb[0].mxu0
  %v222 = vadd.f32 0.0, %v221
  %v223 = vpop.f32.mrb[0].mxu0
  %v224 = vpop.f32.mrb[0].mxu0
  %v225 = vadd.f32 0.0, %v224
  %v226 = vpop.f32.mrb[0].mxu0
  %227 = vmatprep.mubr.bf16.mxu0 0
  %228 = vmatmul.mubr.bf16.gmra.mrb[0].mxu0 %v117
  %v229 = vpop.f32.mrb[0].mxu0
  %v230 = vadd.f32 0.0, %v229
  %v231 = vpop.f32.mrb[0].mxu0
  %v232 = vpop.f32.mrb[0].mxu0
  %v233 = vadd.f32 0.0, %v232
  %v234 = vpop.f32.mrb[0].mxu0
  %235 = vmatprep.mubr.bf16.mxu0 0
  %236 = vmatmul.mubr.bf16.gmra.mrb[0].mxu0 %v118
  %v237 = vpop.f32.mrb[0].mxu0
  %v238 = vadd.f32 0.0, %v237
  %v239 = vpop.f32.mrb[0].mxu0
  %v240 = vpop.f32.mrb[0].mxu0
  %v241 = vadd.f32 0.0, %v240
  %v242 = vpop.f32.mrb[0].mxu0
  %243 = vmatprep.mubr.bf16.mxu0 0
  %244 = vmatmul.mubr.bf16.gmra.mrb[0].mxu0 %v119
  %v245 = vpop.f32.mrb[0].mxu0
  %v246 = vadd.f32 0.0, %v245
  %v247 = vpop.f32.mrb[0].mxu0
  %v248 = vpop.f32.mrb[0].mxu0
  %v249 = vadd.f32 0.0, %v248
  %v250 = vpop.f32.mrb[0].mxu0
  %251 = vmatprep.mubr.bf16.mxu0 0
  %252 = vmatmul.mubr.bf16.gmra.mrb[0].mxu0 %v120
  %v253 = vpop.f32.mrb[0].mxu0
  %v254 = vadd.f32 0.0, %v253
  %v255 = vpop.f32.mrb[0].mxu0
  %v256 = vpop.f32.mrb[0].mxu0
  %v257 = vadd.f32 0.0, %v256
  %v258 = vpop.f32.mrb[0].mxu0
  %259 = vmatprep.mubr.bf16.mxu0 0
  %260 = vmatmul.mubr.bf16.gmra.mrb[0].mxu0 %v121
  %v261 = vpop.f32.mrb[0].mxu0
  %v262 = vadd.f32 0.0, %v261
  %v263 = vpop.f32.mrb[0].mxu0
  %v264 = vpop.f32.mrb[0].mxu0
  %v265 = vadd.f32 0.0, %v264
  %v266 = vpop.f32.mrb[0].mxu0
  %267 = vmatprep.mubr.bf16.mxu0 0
  %268 = vmatmul.mubr.bf16.gmra.mrb[0].mxu0 %v122
  %v269 = vpop.f32.mrb[0].mxu0
  %v270 = vadd.f32 0.0, %v269
  %v271 = vpop.f32.mrb[0].mxu0
  %v272 = vpop.f32.mrb[0].mxu0
  %v273 = vadd.f32 0.0, %v272
  %v274 = vpop.f32.mrb[0].mxu0
  %275 = vdwg.mxu0
  %v276 = vadd.f32 %v35, %v214
  %v277 = vadd.f32 %v36, %v217
  %v278 = vadd.f32 %v37, %v222
  %v279 = vadd.f32 %v38, %v225
  %v280 = vadd.f32 %v39, %v230
  %v281 = vadd.f32 %v40, %v233
  %v282 = vadd.f32 %v41, %v238
  %v283 = vadd.f32 %v42, %v241
  %v284 = vadd.f32 %v43, %v246
  %v285 = vadd.f32 %v44, %v249
  %v286 = vadd.f32 %v45, %v254
  %v287 = vadd.f32 %v46, %v257
  %v288 = vadd.f32 %v47, %v262
  %v289 = vadd.f32 %v48, %v265
  %v290 = vadd.f32 %v49, %v270
  %v291 = vadd.f32 %v50, %v273
  %292 = vst [vmem:[#allocation2] sm:$0xff] %v276
  %293 = vst [vmem:[#allocation2 + $0x8] sm:$0xff] %v277
  %294 = vst [vmem:[#allocation2 + $0x10] sm:$0xff] %v278
  %295 = vst [vmem:[#allocation2 + $0x18] sm:$0xff] %v279
  %296 = vst [vmem:[#allocation2 + $0x20] sm:$0xff] %v280
  %297 = vst [vmem:[#allocation2 + $0x28] sm:$0xff] %v281
  %298 = vst [vmem:[#allocation2 + $0x30] sm:$0xff] %v282
  %299 = vst [vmem:[#allocation2 + $0x38] sm:$0xff] %v283
  %300 = vst [vmem:[#allocation2 + $0x40] sm:$0xff] %v284
  %301 = vst [vmem:[#allocation2 + $0x48] sm:$0xff] %v285
  %302 = vst [vmem:[#allocation2 + $0x50] sm:$0xff] %v286
  %303 = vst [vmem:[#allocation2 + $0x58] sm:$0xff] %v287
  %304 = vst [vmem:[#allocation2 + $0x60] sm:$0xff] %v288
  %305 = vst [vmem:[#allocation2 + $0x68] sm:$0xff] %v289
  %306 = vst [vmem:[#allocation2 + $0x70] sm:$0xff] %v290
  %307 = vst [vmem:[#allocation2 + $0x78] sm:$0xff] %v291
  // Predicated region
  $region18: #{parc_reduced_forward.11} parent=0 // pred_check
    %p308 = pneg %p15
  $region19: #{parc_reduced_forward.11} parent=0 // pred_check_branch
    %310 = sbr.rel (%p308) target = $region21
  $region20: #{parc_reduced_forward.11} parent=0 // pred_region
    %v311 = vld [vmem:[#allocation2] sm:$0xff]
    %v312 = vld [vmem:[#allocation2 + $0x8] sm:$0xff]
    %v313 = vld [vmem:[#allocation2 + $0x10] sm:$0xff]
    %v314 = vld [vmem:[#allocation2 + $0x18] sm:$0xff]
    %v315 = vld [vmem:[#allocation2 + $0x20] sm:$0xff]
    %v316 = vld [vmem:[#allocation2 + $0x28] sm:$0xff]
    %v317 = vld [vmem:[#allocation2 + $0x30] sm:$0xff]
    %v318 = vld [vmem:[#allocation2 + $0x38] sm:$0xff]
    %v319 = vld [vmem:[#allocation2 + $0x40] sm:$0xff]
    %v320 = vld [vmem:[#allocation2 + $0x48] sm:$0xff]
    %v321 = vld [vmem:[#allocation2 + $0x50] sm:$0xff]
    %v322 = vld [vmem:[#allocation2 + $0x58] sm:$0xff]
    %v323 = vld [vmem:[#allocation2 + $0x60] sm:$0xff]
    %v324 = vld [vmem:[#allocation2 + $0x68] sm:$0xff]
    %v325 = vld [vmem:[#allocation2 + $0x70] sm:$0xff]
    %v326 = vld [vmem:[#allocation2 + $0x78] sm:$0xff]
    %v327 = vld [vmem:[%s2] sm:$0x1]
    %v329 = vlaneseq
    %v330 = vshrl.u32 %v329, 7
    %v331 = vsub.s32 0, %v330
    %v332 = vrot.slane %v327, %v331
    %v334 = vadd.f32 %v311, %v332
    %v335 = vadd.f32 %v312, %v332
    %v336 = vadd.f32 %v313, %v332
    %v337 = vadd.f32 %v314, %v332
    %v338 = vadd.f32 %v315, %v332
    %v339 = vadd.f32 %v316, %v332
    %v340 = vadd.f32 %v317, %v332
    %v341 = vadd.f32 %v318, %v332
    %v342 = vadd.f32 %v319, %v332
    %v343 = vadd.f32 %v320, %v332
    %v344 = vadd.f32 %v321, %v332
    %v345 = vadd.f32 %v322, %v332
    %v346 = vadd.f32 %v323, %v332
    %v347 = vadd.f32 %v324, %v332
    %v348 = vadd.f32 %v325, %v332
    %v349 = vadd.f32 %v326, %v332
    %v350 = vmax.f32 %v334, 0.0
    %v351 = vmax.f32 %v335, 0.0
    %v352 = vmax.f32 %v336, 0.0
    %v353 = vmax.f32 %v337, 0.0
    %v354 = vmax.f32 %v338, 0.0
    %v355 = vmax.f32 %v339, 0.0
    %v356 = vmax.f32 %v340, 0.0
    %v357 = vmax.f32 %v341, 0.0
    %v358 = vmax.f32 %v342, 0.0
    %v359 = vmax.f32 %v343, 0.0
    %v360 = vmax.f32 %v344, 0.0
    %v361 = vmax.f32 %v345, 0.0
    %v362 = vmax.f32 %v346, 0.0
    %v363 = vmax.f32 %v347, 0.0
    %v364 = vmax.f32 %v348, 0.0
    %v365 = vmax.f32 %v349, 0.0
    %366 = vst [vmem:[%s3] sm:$0xff] %v350
    %367 = vst [vmem:[%s3 + $0x8] sm:$0xff] %v351
    %368 = vst [vmem:[%s3 + $0x10] sm:$0xff] %v352
    %369 = vst [vmem:[%s3 + $0x18] sm:$0xff] %v353
    %370 = vst [vmem:[%s3 + $0x20] sm:$0xff] %v354
    %371 = vst [vmem:[%s3 + $0x28] sm:$0xff] %v355
    %372 = vst [vmem:[%s3 + $0x30] sm:$0xff] %v356
    %373 = vst [vmem:[%s3 + $0x38] sm:$0xff] %v357
    %374 = vst [vmem:[%s3 + $0x40] sm:$0xff] %v358
    %375 = vst [vmem:[%s3 + $0x48] sm:$0xff] %v359
    %376 = vst [vmem:[%s3 + $0x50] sm:$0xff] %v360
    %377 = vst [vmem:[%s3 + $0x58] sm:$0xff] %v361
    %378 = vst [vmem:[%s3 + $0x60] sm:$0xff] %v362
    %379 = vst [vmem:[%s3 + $0x68] sm:$0xff] %v363
    %380 = vst [vmem:[%s3 + $0x70] sm:$0xff] %v364
    %381 = vst [vmem:[%s3 + $0x78] sm:$0xff] %v365
  $region21: #{parc_reduced_forward.11} parent=0 // pred_fallthru
    _
  // Predicated region
  $region22: #{parc_reduced_forward.11} parent=0 // pred_check
    _
  $region23: #{parc_reduced_forward.11} parent=0 // pred_check_branch
    %383 = sbr.rel (0) target = $region25
  $region24: #{parc_reduced_forward.11} parent=0 // pred_region
    _
  $region25: #{parc_reduced_forward.11} parent=0 // pred_fallthru
    _
  // Predicated region
  $region26: #{parc_reduced_forward.11} parent=0 // pred_check
    _
  $region27: #{parc_reduced_forward.11} parent=0 // pred_check_branch
    %385 = sbr.rel (0) target = $region29
  $region28: #{parc_reduced_forward.11} parent=0 // pred_region
    _
  $region29: #{parc_reduced_forward.11} parent=0 // pred_fallthru
    _

// kernel: parc_reduced_forward.20
$region0: #{parc_reduced_forward.20}
  #allocation0 [shape = 'u32[]', space=smem, size = 0x4, offset = 0x4, fixed_abs, tag = 'smem constant byte address 0x4 - core index']
  #allocation1 [shape = 'u32[144,128]{1,0:T(1,128)}', space=vmem, size = 0x12000, scoped, tag = 'internal scratch']
  #allocation2 [shape = 'f32[128,128]{1,0:T(8,128)}', space=vmem, size = 0x10000, scoped, tag = 'scratch operand']
  %s0 = inlined_call_operand.vmem [shape: bf16[128,128], index: 0, kind: input, shape index: {}]
  %s1 = inlined_call_operand.vmem [shape: bf16[128,128], index: 1, kind: input, shape index: {}]
  %s2 = inlined_call_operand.vmem [shape: f32[1,128], index: 2, kind: input, shape index: {}]
  %s3 = inlined_call_operand.vmem [shape: f32[128,128], index: 3, kind: output, shape index: {}]
  %s4 = sld [smem:[#allocation0]]
  $region30: #{parc_reduced_forward.20} parent=0
    _
  %s6 = ssub.s32 1, %s4
  %s7 = scalar_select 0, %s6, %s4
  // Predicated region
  $region2: #{parc_reduced_forward.20} parent=0 // pred_check
    _
  $region3: #{parc_reduced_forward.20} parent=0 // pred_check_branch
    %9 = sbr.rel (0) target = $region5
  $region4: #{parc_reduced_forward.20} parent=0 // pred_region
    _
  $region5: #{parc_reduced_forward.20} parent=0 // pred_fallthru
    _
  // Predicated region
  $region6: #{parc_reduced_forward.20} parent=0 // pred_check
    _
  $region7: #{parc_reduced_forward.20} parent=0 // pred_check_branch
    %11 = sbr.rel (0) target = $region9
  $region8: #{parc_reduced_forward.20} parent=0 // pred_region
    _
  $region9: #{parc_reduced_forward.20} parent=0 // pred_fallthru
    _
  // Predicated region
  $region10: #{parc_reduced_forward.20} parent=0 // pred_check
    _
  $region11: #{parc_reduced_forward.20} parent=0 // pred_check_branch
    %13 = sbr.rel (0) target = $region13
  $region12: #{parc_reduced_forward.20} parent=0 // pred_region
    _
  $region13: #{parc_reduced_forward.20} parent=0 // pred_fallthru
    _
  %p15 = scmp.eq.s32.totalorder 0, 0
  // Predicated region
  $region14: #{parc_reduced_forward.20} parent=0 // pred_check
    %p16 = pneg %p15
  $region15: #{parc_reduced_forward.20} parent=0 // pred_check_branch
    %18 = sbr.rel (%p16) target = $region17
  $region16: #{parc_reduced_forward.20} parent=0 // pred_region
    %19 = vst [vmem:[#allocation2] sm:$0xff] 0.0
    %20 = vst [vmem:[#allocation2 + $0x8] sm:$0xff] 0.0
    %21 = vst [vmem:[#allocation2 + $0x10] sm:$0xff] 0.0
    %22 = vst [vmem:[#allocation2 + $0x18] sm:$0xff] 0.0
    %23 = vst [vmem:[#allocation2 + $0x20] sm:$0xff] 0.0
    %24 = vst [vmem:[#allocation2 + $0x28] sm:$0xff] 0.0
    %25 = vst [vmem:[#allocation2 + $0x30] sm:$0xff] 0.0
    %26 = vst [vmem:[#allocation2 + $0x38] sm:$0xff] 0.0
    %27 = vst [vmem:[#allocation2 + $0x40] sm:$0xff] 0.0
    %28 = vst [vmem:[#allocation2 + $0x48] sm:$0xff] 0.0
    %29 = vst [vmem:[#allocation2 + $0x50] sm:$0xff] 0.0
    %30 = vst [vmem:[#allocation2 + $0x58] sm:$0xff] 0.0
    %31 = vst [vmem:[#allocation2 + $0x60] sm:$0xff] 0.0
    %32 = vst [vmem:[#allocation2 + $0x68] sm:$0xff] 0.0
    %33 = vst [vmem:[#allocation2 + $0x70] sm:$0xff] 0.0
    %34 = vst [vmem:[#allocation2 + $0x78] sm:$0xff] 0.0
  $region17: #{parc_reduced_forward.20} parent=0 // pred_fallthru
    _
  %v35 = vld [vmem:[#allocation2] sm:$0xff]
  %v36 = vld [vmem:[#allocation2 + $0x8] sm:$0xff]
  %v37 = vld [vmem:[#allocation2 + $0x10] sm:$0xff]
  %v38 = vld [vmem:[#allocation2 + $0x18] sm:$0xff]
  %v39 = vld [vmem:[#allocation2 + $0x20] sm:$0xff]
  %v40 = vld [vmem:[#allocation2 + $0x28] sm:$0xff]
  %v41 = vld [vmem:[#allocation2 + $0x30] sm:$0xff]
  %v42 = vld [vmem:[#allocation2 + $0x38] sm:$0xff]
  %v43 = vld [vmem:[#allocation2 + $0x40] sm:$0xff]
  %v44 = vld [vmem:[#allocation2 + $0x48] sm:$0xff]
  %v45 = vld [vmem:[#allocation2 + $0x50] sm:$0xff]
  %v46 = vld [vmem:[#allocation2 + $0x58] sm:$0xff]
  %v47 = vld [vmem:[#allocation2 + $0x60] sm:$0xff]
  %v48 = vld [vmem:[#allocation2 + $0x68] sm:$0xff]
  %v49 = vld [vmem:[#allocation2 + $0x70] sm:$0xff]
  %v50 = vld [vmem:[#allocation2 + $0x78] sm:$0xff]
  %v51 = vld [vmem:[%s0] sm:$0xf]
  %v52 = vld [vmem:[%s0 + $0x4] sm:$0xf]
  %v53 = vld [vmem:[%s0 + $0x8] sm:$0xf]
  %v54 = vld [vmem:[%s0 + $0xc] sm:$0xf]
  %v55 = vld [vmem:[%s0 + $0x10] sm:$0xf]
  %v56 = vld [vmem:[%s0 + $0x14] sm:$0xf]
  %v57 = vld [vmem:[%s0 + $0x18] sm:$0xf]
  %v58 = vld [vmem:[%s0 + $0x1c] sm:$0xf]
  %v59 = vld [vmem:[%s0 + $0x20] sm:$0xf]
  %v60 = vld [vmem:[%s0 + $0x24] sm:$0xf]
  %v61 = vld [vmem:[%s0 + $0x28] sm:$0xf]
  %v62 = vld [vmem:[%s0 + $0x2c] sm:$0xf]
  %v63 = vld [vmem:[%s0 + $0x30] sm:$0xf]
  %v64 = vld [vmem:[%s0 + $0x34] sm:$0xf]
  %v65 = vld [vmem:[%s0 + $0x38] sm:$0xf]
  %v66 = vld [vmem:[%s0 + $0x3c] sm:$0xf]
  %v67 = vld [vmem:[%s1] sm:$0xf]
  %v68 = vld [vmem:[%s1 + $0x4] sm:$0xf]
  %v69 = vld [vmem:[%s1 + $0x8] sm:$0xf]
  %v70 = vld [vmem:[%s1 + $0xc] sm:$0xf]
  %v71 = vld [vmem:[%s1 + $0x10] sm:$0xf]
  %v72 = vld [vmem:[%s1 + $0x14] sm:$0xf]
  %v73 = vld [vmem:[%s1 + $0x18] sm:$0xf]
  %v74 = vld [vmem:[%s1 + $0x1c] sm:$0xf]
  %v75 = vld [vmem:[%s1 + $0x20] sm:$0xf]
  %v76 = vld [vmem:[%s1 + $0x24] sm:$0xf]
  %v77 = vld [vmem:[%s1 + $0x28] sm:$0xf]
  %v78 = vld [vmem:[%s1 + $0x2c] sm:$0xf]
  %v79 = vld [vmem:[%s1 + $0x30] sm:$0xf]
  %v80 = vld [vmem:[%s1 + $0x34] sm:$0xf]
  %v81 = vld [vmem:[%s1 + $0x38] sm:$0xf]
  %v82 = vld [vmem:[%s1 + $0x3c] sm:$0xf]
  %v99 = vunpack.c.l.b16 %v51
  %v100 = vunpack.c.l.b16 %v52
  %v101 = vunpack.c.l.b16 %v53
  %v102 = vunpack.c.l.b16 %v54
  %v103 = vunpack.c.l.b16 %v55
  %v104 = vunpack.c.l.b16 %v56
  %v105 = vunpack.c.l.b16 %v57
  %v106 = vunpack.c.l.b16 %v58
  %v107 = vunpack.c.l.b16 %v59
  %v108 = vunpack.c.l.b16 %v60
  %v109 = vunpack.c.l.b16 %v61
  %v110 = vunpack.c.l.b16 %v62
  %v111 = vunpack.c.l.b16 %v63
  %v112 = vunpack.c.l.b16 %v64
  %v113 = vunpack.c.l.b16 %v65
  %v114 = vunpack.c.l.b16 %v66
  %v115 = vpack.c.b16 %v100, %v99
  %v116 = vpack.c.b16 %v102, %v101
  %v117 = vpack.c.b16 %v104, %v103
  %v118 = vpack.c.b16 %v106, %v105
  %v119 = vpack.c.b16 %v108, %v107
  %v120 = vpack.c.b16 %v110, %v109
  %v121 = vpack.c.b16 %v112, %v111
  %v122 = vpack.c.b16 %v114, %v113
  %v147 = vunpack.c.l.b16 %v67
  %v148 = vunpack.c.l.b16 %v68
  %v149 = vunpack.c.l.b16 %v69
  %v150 = vunpack.c.l.b16 %v70
  %v151 = vunpack.c.l.b16 %v71
  %v152 = vunpack.c.l.b16 %v72
  %v153 = vunpack.c.l.b16 %v73
  %v154 = vunpack.c.l.b16 %v74
  %v155 = vunpack.c.l.b16 %v75
  %v156 = vunpack.c.l.b16 %v76
  %v157 = vunpack.c.l.b16 %v77
  %v158 = vunpack.c.l.b16 %v78
  %v159 = vunpack.c.l.b16 %v79
  %v160 = vunpack.c.l.b16 %v80
  %v161 = vunpack.c.l.b16 %v81
  %v162 = vunpack.c.l.b16 %v82
  %v163 = vpack.c.b16 %v148, %v147
  %v164 = vpack.c.b16 %v150, %v149
  %v165 = vpack.c.b16 %v152, %v151
  %v166 = vpack.c.b16 %v154, %v153
  %v167 = vpack.c.b16 %v156, %v155
  %v168 = vpack.c.b16 %v158, %v157
  %v169 = vpack.c.b16 %v160, %v159
  %v170 = vpack.c.b16 %v162, %v161
  %179 = vmatprep.subr.bf16.mxu0 0
  %180 = vmatpush1.bf16.msra.mxu0 %v163
  %181 = vmatprep.subr.bf16.mxu0 0
  %182 = vmatpush1.bf16.msra.mxu0 %v164
  %183 = vmatprep.subr.bf16.mxu0 0
  %184 = vmatpush1.bf16.msra.mxu0 %v165
  %185 = vmatprep.subr.bf16.mxu0 0
  %186 = vmatpush1.bf16.msra.mxu0 %v166
  %187 = vmatprep.subr.bf16.mxu0 0
  %188 = vmatpush1.bf16.msra.mxu0 %v167
  %189 = vmatprep.subr.bf16.mxu0 0
  %190 = vmatpush1.bf16.msra.mxu0 %v168
  %191 = vmatprep.subr.bf16.mxu0 0
  %192 = vmatpush1.bf16.msra.mxu0 %v169
  %193 = vmatprep.subr.bf16.mxu0 0
  %194 = vmatpush1.bf16.msra.mxu0 %v170
  %195 = vmatprep.subr.bf16.mxu0 0
  %196 = vmatpush1.bf16.msra.mxu0 0
  %197 = vmatprep.subr.bf16.mxu0 0
  %198 = vmatpush1.bf16.msra.mxu0 0
  %199 = vmatprep.subr.bf16.mxu0 0
  %200 = vmatpush1.bf16.msra.mxu0 0
  %201 = vmatprep.subr.bf16.mxu0 0
  %202 = vmatpush1.bf16.msra.mxu0 0
  %203 = vmatprep.subr.bf16.mxu0 0
  %204 = vmatpush1.bf16.msra.mxu0 0
  %205 = vmatprep.subr.bf16.mxu0 0
  %206 = vmatpush1.bf16.msra.mxu0 0
  %207 = vmatprep.subr.bf16.mxu0 0
  %208 = vmatpush1.bf16.msra.mxu0 0
  %209 = vmatprep.subr.bf16.mxu0 0
  %210 = vmatpush1.bf16.msra.mxu0 0
  %211 = vmatprep.mubr.bf16.mxu0 0
  %212 = vmatmul.mubr.bf16.gmra.mrb[0].mxu0 %v115
  %v213 = vpop.f32.mrb[0].mxu0
  %v214 = vadd.f32 0.0, %v213
  %v215 = vpop.f32.mrb[0].mxu0
  %v216 = vpop.f32.mrb[0].mxu0
  %v217 = vadd.f32 0.0, %v216
  %v218 = vpop.f32.mrb[0].mxu0
  %219 = vmatprep.mubr.bf16.mxu0 0
  %220 = vmatmul.mubr.bf16.gmra.mrb[0].mxu0 %v116
  %v221 = vpop.f32.mrb[0].mxu0
  %v222 = vadd.f32 0.0, %v221
  %v223 = vpop.f32.mrb[0].mxu0
  %v224 = vpop.f32.mrb[0].mxu0
  %v225 = vadd.f32 0.0, %v224
  %v226 = vpop.f32.mrb[0].mxu0
  %227 = vmatprep.mubr.bf16.mxu0 0
  %228 = vmatmul.mubr.bf16.gmra.mrb[0].mxu0 %v117
  %v229 = vpop.f32.mrb[0].mxu0
  %v230 = vadd.f32 0.0, %v229
  %v231 = vpop.f32.mrb[0].mxu0
  %v232 = vpop.f32.mrb[0].mxu0
  %v233 = vadd.f32 0.0, %v232
  %v234 = vpop.f32.mrb[0].mxu0
  %235 = vmatprep.mubr.bf16.mxu0 0
  %236 = vmatmul.mubr.bf16.gmra.mrb[0].mxu0 %v118
  %v237 = vpop.f32.mrb[0].mxu0
  %v238 = vadd.f32 0.0, %v237
  %v239 = vpop.f32.mrb[0].mxu0
  %v240 = vpop.f32.mrb[0].mxu0
  %v241 = vadd.f32 0.0, %v240
  %v242 = vpop.f32.mrb[0].mxu0
  %243 = vmatprep.mubr.bf16.mxu0 0
  %244 = vmatmul.mubr.bf16.gmra.mrb[0].mxu0 %v119
  %v245 = vpop.f32.mrb[0].mxu0
  %v246 = vadd.f32 0.0, %v245
  %v247 = vpop.f32.mrb[0].mxu0
  %v248 = vpop.f32.mrb[0].mxu0
  %v249 = vadd.f32 0.0, %v248
  %v250 = vpop.f32.mrb[0].mxu0
  %251 = vmatprep.mubr.bf16.mxu0 0
  %252 = vmatmul.mubr.bf16.gmra.mrb[0].mxu0 %v120
  %v253 = vpop.f32.mrb[0].mxu0
  %v254 = vadd.f32 0.0, %v253
  %v255 = vpop.f32.mrb[0].mxu0
  %v256 = vpop.f32.mrb[0].mxu0
  %v257 = vadd.f32 0.0, %v256
  %v258 = vpop.f32.mrb[0].mxu0
  %259 = vmatprep.mubr.bf16.mxu0 0
  %260 = vmatmul.mubr.bf16.gmra.mrb[0].mxu0 %v121
  %v261 = vpop.f32.mrb[0].mxu0
  %v262 = vadd.f32 0.0, %v261
  %v263 = vpop.f32.mrb[0].mxu0
  %v264 = vpop.f32.mrb[0].mxu0
  %v265 = vadd.f32 0.0, %v264
  %v266 = vpop.f32.mrb[0].mxu0
  %267 = vmatprep.mubr.bf16.mxu0 0
  %268 = vmatmul.mubr.bf16.gmra.mrb[0].mxu0 %v122
  %v269 = vpop.f32.mrb[0].mxu0
  %v270 = vadd.f32 0.0, %v269
  %v271 = vpop.f32.mrb[0].mxu0
  %v272 = vpop.f32.mrb[0].mxu0
  %v273 = vadd.f32 0.0, %v272
  %v274 = vpop.f32.mrb[0].mxu0
  %275 = vdwg.mxu0
  %v276 = vadd.f32 %v35, %v214
  %v277 = vadd.f32 %v36, %v217
  %v278 = vadd.f32 %v37, %v222
  %v279 = vadd.f32 %v38, %v225
  %v280 = vadd.f32 %v39, %v230
  %v281 = vadd.f32 %v40, %v233
  %v282 = vadd.f32 %v41, %v238
  %v283 = vadd.f32 %v42, %v241
  %v284 = vadd.f32 %v43, %v246
  %v285 = vadd.f32 %v44, %v249
  %v286 = vadd.f32 %v45, %v254
  %v287 = vadd.f32 %v46, %v257
  %v288 = vadd.f32 %v47, %v262
  %v289 = vadd.f32 %v48, %v265
  %v290 = vadd.f32 %v49, %v270
  %v291 = vadd.f32 %v50, %v273
  %292 = vst [vmem:[#allocation2] sm:$0xff] %v276
  %293 = vst [vmem:[#allocation2 + $0x8] sm:$0xff] %v277
  %294 = vst [vmem:[#allocation2 + $0x10] sm:$0xff] %v278
  %295 = vst [vmem:[#allocation2 + $0x18] sm:$0xff] %v279
  %296 = vst [vmem:[#allocation2 + $0x20] sm:$0xff] %v280
  %297 = vst [vmem:[#allocation2 + $0x28] sm:$0xff] %v281
  %298 = vst [vmem:[#allocation2 + $0x30] sm:$0xff] %v282
  %299 = vst [vmem:[#allocation2 + $0x38] sm:$0xff] %v283
  %300 = vst [vmem:[#allocation2 + $0x40] sm:$0xff] %v284
  %301 = vst [vmem:[#allocation2 + $0x48] sm:$0xff] %v285
  %302 = vst [vmem:[#allocation2 + $0x50] sm:$0xff] %v286
  %303 = vst [vmem:[#allocation2 + $0x58] sm:$0xff] %v287
  %304 = vst [vmem:[#allocation2 + $0x60] sm:$0xff] %v288
  %305 = vst [vmem:[#allocation2 + $0x68] sm:$0xff] %v289
  %306 = vst [vmem:[#allocation2 + $0x70] sm:$0xff] %v290
  %307 = vst [vmem:[#allocation2 + $0x78] sm:$0xff] %v291
  // Predicated region
  $region18: #{parc_reduced_forward.20} parent=0 // pred_check
    %p308 = pneg %p15
  $region19: #{parc_reduced_forward.20} parent=0 // pred_check_branch
    %310 = sbr.rel (%p308) target = $region21
  $region20: #{parc_reduced_forward.20} parent=0 // pred_region
    %v311 = vld [vmem:[#allocation2] sm:$0xff]
    %v312 = vld [vmem:[#allocation2 + $0x8] sm:$0xff]
    %v313 = vld [vmem:[#allocation2 + $0x10] sm:$0xff]
    %v314 = vld [vmem:[#allocation2 + $0x18] sm:$0xff]
    %v315 = vld [vmem:[#allocation2 + $0x20] sm:$0xff]
    %v316 = vld [vmem:[#allocation2 + $0x28] sm:$0xff]
    %v317 = vld [vmem:[#allocation2 + $0x30] sm:$0xff]
    %v318 = vld [vmem:[#allocation2 + $0x38] sm:$0xff]
    %v319 = vld [vmem:[#allocation2 + $0x40] sm:$0xff]
    %v320 = vld [vmem:[#allocation2 + $0x48] sm:$0xff]
    %v321 = vld [vmem:[#allocation2 + $0x50] sm:$0xff]
    %v322 = vld [vmem:[#allocation2 + $0x58] sm:$0xff]
    %v323 = vld [vmem:[#allocation2 + $0x60] sm:$0xff]
    %v324 = vld [vmem:[#allocation2 + $0x68] sm:$0xff]
    %v325 = vld [vmem:[#allocation2 + $0x70] sm:$0xff]
    %v326 = vld [vmem:[#allocation2 + $0x78] sm:$0xff]
    %v327 = vld [vmem:[%s2] sm:$0x1]
    %v329 = vlaneseq
    %v330 = vshrl.u32 %v329, 7
    %v331 = vsub.s32 0, %v330
    %v332 = vrot.slane %v327, %v331
    %v334 = vadd.f32 %v311, %v332
    %v335 = vadd.f32 %v312, %v332
    %v336 = vadd.f32 %v313, %v332
    %v337 = vadd.f32 %v314, %v332
    %v338 = vadd.f32 %v315, %v332
    %v339 = vadd.f32 %v316, %v332
    %v340 = vadd.f32 %v317, %v332
    %v341 = vadd.f32 %v318, %v332
    %v342 = vadd.f32 %v319, %v332
    %v343 = vadd.f32 %v320, %v332
    %v344 = vadd.f32 %v321, %v332
    %v345 = vadd.f32 %v322, %v332
    %v346 = vadd.f32 %v323, %v332
    %v347 = vadd.f32 %v324, %v332
    %v348 = vadd.f32 %v325, %v332
    %v349 = vadd.f32 %v326, %v332
    %350 = vst [vmem:[%s3] sm:$0xff] %v334
    %351 = vst [vmem:[%s3 + $0x8] sm:$0xff] %v335
    %352 = vst [vmem:[%s3 + $0x10] sm:$0xff] %v336
    %353 = vst [vmem:[%s3 + $0x18] sm:$0xff] %v337
    %354 = vst [vmem:[%s3 + $0x20] sm:$0xff] %v338
    %355 = vst [vmem:[%s3 + $0x28] sm:$0xff] %v339
    %356 = vst [vmem:[%s3 + $0x30] sm:$0xff] %v340
    %357 = vst [vmem:[%s3 + $0x38] sm:$0xff] %v341
    %358 = vst [vmem:[%s3 + $0x40] sm:$0xff] %v342
    %359 = vst [vmem:[%s3 + $0x48] sm:$0xff] %v343
    %360 = vst [vmem:[%s3 + $0x50] sm:$0xff] %v344
    %361 = vst [vmem:[%s3 + $0x58] sm:$0xff] %v345
    %362 = vst [vmem:[%s3 + $0x60] sm:$0xff] %v346
    %363 = vst [vmem:[%s3 + $0x68] sm:$0xff] %v347
    %364 = vst [vmem:[%s3 + $0x70] sm:$0xff] %v348
    %365 = vst [vmem:[%s3 + $0x78] sm:$0xff] %v349
  $region21: #{parc_reduced_forward.20} parent=0 // pred_fallthru
    _
  // Predicated region
  $region22: #{parc_reduced_forward.20} parent=0 // pred_check
    _
  $region23: #{parc_reduced_forward.20} parent=0 // pred_check_branch
    %367 = sbr.rel (0) target = $region25
  $region24: #{parc_reduced_forward.20} parent=0 // pred_region
    _
  $region25: #{parc_reduced_forward.20} parent=0 // pred_fallthru
    _
  // Predicated region
  $region26: #{parc_reduced_forward.20} parent=0 // pred_check
    _
  $region27: #{parc_reduced_forward.20} parent=0 // pred_check_branch
    %369 = sbr.rel (0) target = $region29
  $region28: #{parc_reduced_forward.20} parent=0 // pred_region
    _
  $region29: #{parc_reduced_forward.20} parent=0 // pred_fallthru
    _

// kernel: parc_reduced_forward.21
$region0: #{parc_reduced_forward.21}
  #allocation0 [shape = 'u32[]', space=smem, size = 0x4, offset = 0x4, fixed_abs, tag = 'smem constant byte address 0x4 - core index']
  #allocation1 [shape = 'u32[144,128]{1,0:T(1,128)}', space=vmem, size = 0x12000, scoped, tag = 'internal scratch']
  #allocation2 [shape = 'f32[128,128]{1,0:T(8,128)}', space=vmem, size = 0x10000, scoped, tag = 'scratch operand']
  #allocation3 [shape = 'f32[128,128]{1,0:T(8,128)}', space=vmem, size = 0x10000, scoped, tag = 'scratch operand']
  #allocation4 [shape = 's32[1]{0}', space=sflag, size = 0x4, scoped, tag = 'scoped memory for parc_reduced_forward.21']
  #allocation5 [shape = 'u8[512]{0}', space=smem, size = 0x200, scoped, tag = 'prefetched SMEM operand 0']
  #allocation6 [shape = 'u8[512]{0}', space=smem, size = 0x200, scoped, tag = 'prefetched SMEM operand 1']
  #allocation7 [shape = 'u8[512]{0}', space=smem, size = 0x200, scoped, tag = 'prefetched SMEM operand 2']
  %s0 = inlined_call_operand.vmem [shape: s32[10], index: 0, kind: input, shape index: {}]
  %s1 = inlined_call_operand.vmem [shape: s32[10], index: 1, kind: input, shape index: {}]
  %s2 = inlined_call_operand.vmem [shape: s32[10], index: 2, kind: input, shape index: {}]
  %s3 = inlined_call_operand.vmem [shape: bf16[128,128], index: 3, kind: input, shape index: {}]
  %s4 = inlined_call_operand.vmem [shape: f32[128,128], index: 4, kind: input, shape index: {}]
  %s5 = inlined_call_operand.vmem [shape: f32[10,128,128], index: 5, kind: input, shape index: {}]
  %s6 = inlined_call_operand.vmem [shape: f32[10,1,128], index: 6, kind: input, shape index: {}]
  %s7 = inlined_call_operand.vmem [shape: f32[128,128], index: 7, kind: output, shape index: {}]
  %s8 = sld [smem:[#allocation0]]
  $region69: #{parc_reduced_forward.21} parent=0
    _
  %s10 = ssub.s32 1, %s8
  %s11 = scalar_select 0, %s10, %s8
  %s12 = sshll.u32 %s0, 4
  %s13 = int_to_ptr.vmem [resolvable:$true] %s12
  %15 = dma.vmem_to_smem %s13, 16, [#allocation5], [#allocation4]
  %s16 = sshll.u32 %s1, 4
  %s17 = int_to_ptr.vmem [resolvable:$true] %s16
  %19 = dma.vmem_to_smem %s17, 16, [#allocation6], [#allocation4]
  %s20 = sshll.u32 %s2, 4
  %s21 = int_to_ptr.vmem [resolvable:$true] %s20
  %23 = dma.vmem_to_smem %s21, 16, [#allocation7], [#allocation4]
  %24 = dma.done [#allocation4], 48
  %25 = sfence
  loop: start=0, step=1, limit=12
  $region2: #{parc_reduced_forward.21} parent=0 // loop_pre_header
    _
  $region3: #{parc_reduced_forward.21} parent=0 // loop_header
    %s27 = sphi 0, %s31
    %p28 = scmp.ge.s32.totalorder %s27, 12
    %s35 = sphi 0, %s35
    %s37 = sphi 0, %s35
    %s38 = sphi 0, %s37
    %s52 = sphi 0, %s38
    %s56 = sphi 0, %s56
    %s58 = sphi 0, %s56
    %s59 = sphi 0, %s58
    %s73 = sphi 0, %s59
    %s79 = sphi 0, %s81
    %s82 = sphi 0, %s79
    %s83 = sphi 0, %s82
    %s99 = sphi 0, %s83
    %s105 = sphi 0, %s107
    %s108 = sphi 0, %s105
    %s109 = sphi 0, %s108
    %s125 = sphi 0, %s109
    %s129 = sphi 0, %s129
    %s131 = sphi 0, %s129
    %s132 = sphi 0, %s131
    %s146 = sphi 0, %s132
  $region4: #{parc_reduced_forward.21} parent=0 // loop_header_branch
    %30 = sbr.rel (%p28) target = $region8
  $region5: #{parc_reduced_forward.21} parent=0 // loop_body
    %s32 = ssub.s32 %s27, 1
    %s33 = ssub.s32 %s27, 2
    %s34 = sadd.s32 %s27, 1
    %s36 = sadd.s32 %s35, 1
    %p39 = scmp.eq.s32.totalorder %s27, 9
    %p40 = scmp.ne.s32.totalorder %s35, %s37
    %p41 = scmp.eq.s32.totalorder %s27, 0
    %p42 = por %p40, %p41
    %p43 = scmp.ne.s32.totalorder %s35, %s37
    %p44 = scmp.eq.s32.totalorder %s32, 9
    %p45 = por %p43, %p44
    %p46 = scmp.ne.s32.totalorder %s37, %s38
    %p47 = scmp.eq.s32.totalorder %s32, 0
    %p48 = por %p46, %p47
    %p49 = scmp.ne.s32.totalorder %s37, %s38
    %p50 = scmp.eq.s32.totalorder %s33, 9
    %p51 = por %p49, %p50
    %p53 = scmp.ne.s32.totalorder %s38, %s52
    %p54 = scmp.eq.s32.totalorder %s33, 0
    %p55 = por %p53, %p54
    %s57 = sadd.s32 %s56, 1
    %p60 = scmp.eq.s32.totalorder %s27, 9
    %p61 = scmp.ne.s32.totalorder %s56, %s58
    %p62 = scmp.eq.s32.totalorder %s27, 0
    %p63 = por %p61, %p62
    %p64 = scmp.ne.s32.totalorder %s56, %s58
    %p65 = scmp.eq.s32.totalorder %s32, 9
    %p66 = por %p64, %p65
    %p67 = scmp.ne.s32.totalorder %s58, %s59
    %p68 = scmp.eq.s32.totalorder %s32, 0
    %p69 = por %p67, %p68
    %p70 = scmp.ne.s32.totalorder %s58, %s59
    %p71 = scmp.eq.s32.totalorder %s33, 9
    %p72 = por %p70, %p71
    %p74 = scmp.ne.s32.totalorder %s59, %s73
    %p75 = scmp.eq.s32.totalorder %s33, 0
    %p76 = por %p74, %p75
    %s77 = ssub.s32 %s27, %s34
    %p78 = scmp.eq.s32.totalorder %s77, 0
    %s80 = sadd.s32 %s79, 1
    %s81 = scalar_select %p78, %s79, %s80
    %p84 = pneg %p78
    %p85 = scmp.eq.s32.totalorder %s27, 9
    %p86 = por %p84, %p85
    %p87 = scmp.ne.s32.totalorder %s79, %s82
    %p88 = scmp.eq.s32.totalorder %s27, 0
    %p89 = por %p87, %p88
    %p90 = scmp.ne.s32.totalorder %s79, %s82
    %p91 = scmp.eq.s32.totalorder %s32, 9
    %p92 = por %p90, %p91
    %p93 = scmp.ne.s32.totalorder %s82, %s83
    %p94 = scmp.eq.s32.totalorder %s32, 0
    %p95 = por %p93, %p94
    %p96 = scmp.ne.s32.totalorder %s82, %s83
    %p97 = scmp.eq.s32.totalorder %s33, 9
    %p98 = por %p96, %p97
    %p100 = scmp.ne.s32.totalorder %s83, %s99
    %p101 = scmp.eq.s32.totalorder %s33, 0
    %p102 = por %p100, %p101
    %s103 = ssub.s32 %s27, %s34
    %p104 = scmp.eq.s32.totalorder %s103, 0
    %s106 = sadd.s32 %s105, 1
    %s107 = scalar_select %p104, %s105, %s106
    %p110 = pneg %p104
    %p111 = scmp.eq.s32.totalorder %s27, 9
    %p112 = por %p110, %p111
    %p113 = scmp.ne.s32.totalorder %s105, %s108
    %p114 = scmp.eq.s32.totalorder %s27, 0
    %p115 = por %p113, %p114
    %p116 = scmp.ne.s32.totalorder %s105, %s108
    %p117 = scmp.eq.s32.totalorder %s32, 9
    %p118 = por %p116, %p117
    %p119 = scmp.ne.s32.totalorder %s108, %s109
    %p120 = scmp.eq.s32.totalorder %s32, 0
    %p121 = por %p119, %p120
    %p122 = scmp.ne.s32.totalorder %s108, %s109
    %p123 = scmp.eq.s32.totalorder %s33, 9
    %p124 = por %p122, %p123
    %p126 = scmp.ne.s32.totalorder %s109, %s125
    %p127 = scmp.eq.s32.totalorder %s33, 0
    %p128 = por %p126, %p127
    %s130 = sadd.s32 %s129, 1
    %p133 = scmp.eq.s32.totalorder %s27, 9
    %p134 = scmp.ne.s32.totalorder %s129, %s131
    %p135 = scmp.eq.s32.totalorder %s27, 0
    %p136 = por %p134, %p135
    %p137 = scmp.ne.s32.totalorder %s129, %s131
    %p138 = scmp.eq.s32.totalorder %s32, 9
    %p139 = por %p137, %p138
    %p140 = scmp.ne.s32.totalorder %s131, %s132
    %p141 = scmp.eq.s32.totalorder %s32, 0
    %p142 = por %p140, %p141
    %p143 = scmp.ne.s32.totalorder %s131, %s132
    %p144 = scmp.eq.s32.totalorder %s33, 9
    %p145 = por %p143, %p144
    %p147 = scmp.ne.s32.totalorder %s132, %s146
    %p148 = scmp.eq.s32.totalorder %s33, 0
    %p149 = por %p147, %p148
    %p150 = scmp.le.s32.totalorder 1, %s27
    %p151 = scmp.lt.s32.totalorder %s27, 11
    %p152 = pnand %p150, %p151
    %p153 = pneg %p152
    // Predicated region
    $region9: #{parc_reduced_forward.21} parent=5 // pred_check
      _
    $region10: #{parc_reduced_forward.21} parent=5 // pred_check_branch
      %155 = sbr.rel (%p152) target = $region12
    $region11: #{parc_reduced_forward.21} parent=5 // pred_region
      %s156 = ssub.s32 %s27, 1
      // Predicated region
      $region13: #{parc_reduced_forward.21} parent=11 // pred_check
        %p157 = pneg %p48
      $region14: #{parc_reduced_forward.21} parent=11 // pred_check_branch
        %159 = sbr.rel (%p157) target = $region16
      $region15: #{parc_reduced_forward.21} parent=11 // pred_region
        _
      $region16: #{parc_reduced_forward.21} parent=11 // pred_fallthru
        _
      // Predicated region
      $region17: #{parc_reduced_forward.21} parent=11 // pred_check
        %p160 = pneg %p69
      $region18: #{parc_reduced_forward.21} parent=11 // pred_check_branch
        %162 = sbr.rel (%p160) target = $region20
      $region19: #{parc_reduced_forward.21} parent=11 // pred_region
        _
      $region20: #{parc_reduced_forward.21} parent=11 // pred_fallthru
        _
    $region12: #{parc_reduced_forward.21} parent=5 // pred_fallthru
      _
    %p163 = scmp.lt.s32.totalorder %s27, 10
    // Predicated region
    $region21: #{parc_reduced_forward.21} parent=5 // pred_check
      %p164 = pneg %p163
    $region22: #{parc_reduced_forward.21} parent=5 // pred_check_branch
      %166 = sbr.rel (%p164) target = $region24
    $region23: #{parc_reduced_forward.21} parent=5 // pred_region
      // Predicated region
      $region25: #{parc_reduced_forward.21} parent=23 // pred_check
        %p167 = pneg %p89
      $region26: #{parc_reduced_forward.21} parent=23 // pred_check_branch
        %169 = sbr.rel (%p167) target = $region28
      $region27: #{parc_reduced_forward.21} parent=23 // pred_region
        %p170 = scmp.lt.s32.totalorder %s27, 9
        %s171 = scalar_select %p170, %s27, 9
        %s172 = smul.addr %s171, 16
        %s173 = smul.addr %s172, 8
        %s174 = scalar_lea.vmem %s5, %s173
      $region28: #{parc_reduced_forward.21} parent=23 // pred_fallthru
        _
      // Predicated region
      $region29: #{parc_reduced_forward.21} parent=23 // pred_check
        %p175 = pneg %p115
      $region30: #{parc_reduced_forward.21} parent=23 // pred_check_branch
        %177 = sbr.rel (%p175) target = $region32
      $region31: #{parc_reduced_forward.21} parent=23 // pred_region
        %p178 = scmp.lt.s32.totalorder %s27, 9
        %s179 = scalar_select %p178, %s27, 9
        %s180 = scalar_lea.vmem %s6, %s179
      $region32: #{parc_reduced_forward.21} parent=23 // pred_fallthru
        _
    $region24: #{parc_reduced_forward.21} parent=5 // pred_fallthru
      _
    %p181 = scmp.le.s32.totalorder 1, %s27
    %p182 = scmp.lt.s32.totalorder %s27, 11
    %p183 = pnand %p181, %p182
    %p184 = pneg %p183
    // Predicated region
    $region33: #{parc_reduced_forward.21} parent=5 // pred_check
      _
    $region34: #{parc_reduced_forward.21} parent=5 // pred_check_branch
      %186 = sbr.rel (%p183) target = $region36
    $region35: #{parc_reduced_forward.21} parent=5 // pred_region
      %s187 = ssub.s32 %s27, 1
      %p188 = pneg %p48
      %p189 = pneg %p45
      %p190 = pneg %p69
      %p191 = pneg %p66
      %p192 = scmp.lt.s32.totalorder %s32, 9
      %s193 = scalar_select %p192, %s32, 9
      %s194 = smul.addr %s193, 16
      %s195 = smul.addr %s194, 8
      %s196 = scalar_lea.vmem %s5, %s195
      %p197 = pneg %p95
      %p198 = pneg %p92
      %p199 = scmp.lt.s32.totalorder %s32, 9
      %s200 = scalar_select %p199, %s32, 9
      %s201 = scalar_lea.vmem %s6, %s200
      %p202 = pneg %p121
      %p203 = pneg %p118
      %p204 = pneg %p142
      %p205 = pneg %p139
      %p206 = scmp.lt.s32.totalorder %s32, 9
      %s207 = scalar_select %p206, %s32, 9
      %s208 = smul.addr %s207, 16
      %s209 = smul.addr %s208, 8
      %s210 = scalar_lea.vmem %s5, %s209
      %p211 = scmp.lt.s32.totalorder %s32, 9
      %s212 = scalar_select %p211, %s32, 9
      %s213 = scalar_lea.vmem %s6, %s212
      %p215 = scmp.eq.s32.totalorder %s32, 0
      // Predicated region
      $region37: #{parc_reduced_forward.21} parent=35 // pred_check
        %p216 = pneg %p215
      $region38: #{parc_reduced_forward.21} parent=35 // pred_check_branch
        %218 = sbr.rel (%p216) target = $region40
      $region39: #{parc_reduced_forward.21} parent=35 // pred_region
        %v219 = vld [vmem:[%s4] sm:$0xff]
        %v220 = vld [vmem:[%s4 + $0x8] sm:$0xff]
        %v221 = vld [vmem:[%s4 + $0x10] sm:$0xff]
        %v222 = vld [vmem:[%s4 + $0x18] sm:$0xff]
        %v223 = vld [vmem:[%s4 + $0x20] sm:$0xff]
        %v224 = vld [vmem:[%s4 + $0x28] sm:$0xff]
        %v225 = vld [vmem:[%s4 + $0x30] sm:$0xff]
        %v226 = vld [vmem:[%s4 + $0x38] sm:$0xff]
        %v227 = vld [vmem:[%s4 + $0x40] sm:$0xff]
        %v228 = vld [vmem:[%s4 + $0x48] sm:$0xff]
        %v229 = vld [vmem:[%s4 + $0x50] sm:$0xff]
        %v230 = vld [vmem:[%s4 + $0x58] sm:$0xff]
        %v231 = vld [vmem:[%s4 + $0x60] sm:$0xff]
        %v232 = vld [vmem:[%s4 + $0x68] sm:$0xff]
        %v233 = vld [vmem:[%s4 + $0x70] sm:$0xff]
        %v234 = vld [vmem:[%s4 + $0x78] sm:$0xff]
        %235 = vst [vmem:[#allocation2] sm:$0xff] %v219
        %236 = vst [vmem:[#allocation2 + $0x8] sm:$0xff] %v220
        %237 = vst [vmem:[#allocation2 + $0x10] sm:$0xff] %v221
        %238 = vst [vmem:[#allocation2 + $0x18] sm:$0xff] %v222
        %239 = vst [vmem:[#allocation2 + $0x20] sm:$0xff] %v223
        %240 = vst [vmem:[#allocation2 + $0x28] sm:$0xff] %v224
        %241 = vst [vmem:[#allocation2 + $0x30] sm:$0xff] %v225
        %242 = vst [vmem:[#allocation2 + $0x38] sm:$0xff] %v226
        %243 = vst [vmem:[#allocation2 + $0x40] sm:$0xff] %v227
        %244 = vst [vmem:[#allocation2 + $0x48] sm:$0xff] %v228
        %245 = vst [vmem:[#allocation2 + $0x50] sm:$0xff] %v229
        %246 = vst [vmem:[#allocation2 + $0x58] sm:$0xff] %v230
        %247 = vst [vmem:[#allocation2 + $0x60] sm:$0xff] %v231
        %248 = vst [vmem:[#allocation2 + $0x68] sm:$0xff] %v232
        %249 = vst [vmem:[#allocation2 + $0x70] sm:$0xff] %v233
        %250 = vst [vmem:[#allocation2 + $0x78] sm:$0xff] %v234
        %251 = vst [vmem:[#allocation3] sm:$0xff] 0.0
        %252 = vst [vmem:[#allocation3 + $0x8] sm:$0xff] 0.0
        %253 = vst [vmem:[#allocation3 + $0x10] sm:$0xff] 0.0
        %254 = vst [vmem:[#allocation3 + $0x18] sm:$0xff] 0.0
        %255 = vst [vmem:[#allocation3 + $0x20] sm:$0xff] 0.0
        %256 = vst [vmem:[#allocation3 + $0x28] sm:$0xff] 0.0
        %257 = vst [vmem:[#allocation3 + $0x30] sm:$0xff] 0.0
        %258 = vst [vmem:[#allocation3 + $0x38] sm:$0xff] 0.0
        %259 = vst [vmem:[#allocation3 + $0x40] sm:$0xff] 0.0
        %260 = vst [vmem:[#allocation3 + $0x48] sm:$0xff] 0.0
        %261 = vst [vmem:[#allocation3 + $0x50] sm:$0xff] 0.0
        %262 = vst [vmem:[#allocation3 + $0x58] sm:$0xff] 0.0
        %263 = vst [vmem:[#allocation3 + $0x60] sm:$0xff] 0.0
        %264 = vst [vmem:[#allocation3 + $0x68] sm:$0xff] 0.0
        %265 = vst [vmem:[#allocation3 + $0x70] sm:$0xff] 0.0
        %266 = vst [vmem:[#allocation3 + $0x78] sm:$0xff] 0.0
      $region40: #{parc_reduced_forward.21} parent=35 // pred_fallthru
        _
      %v267 = vld [vmem:[#allocation2] sm:$0xff]
      %v268 = vld [vmem:[#allocation2 + $0x8] sm:$0xff]
      %v269 = vld [vmem:[#allocation2 + $0x10] sm:$0xff]
      %v270 = vld [vmem:[#allocation2 + $0x18] sm:$0xff]
      %v271 = vld [vmem:[#allocation2 + $0x20] sm:$0xff]
      %v272 = vld [vmem:[#allocation2 + $0x28] sm:$0xff]
      %v273 = vld [vmem:[#allocation2 + $0x30] sm:$0xff]
      %v274 = vld [vmem:[#allocation2 + $0x38] sm:$0xff]
      %v275 = vld [vmem:[#allocation2 + $0x40] sm:$0xff]
      %v276 = vld [vmem:[#allocation2 + $0x48] sm:$0xff]
      %v277 = vld [vmem:[#allocation2 + $0x50] sm:$0xff]
      %v278 = vld [vmem:[#allocation2 + $0x58] sm:$0xff]
      %v279 = vld [vmem:[#allocation2 + $0x60] sm:$0xff]
      %v280 = vld [vmem:[#allocation2 + $0x68] sm:$0xff]
      %v281 = vld [vmem:[#allocation2 + $0x70] sm:$0xff]
      %v282 = vld [vmem:[#allocation2 + $0x78] sm:$0xff]
      %v283 = vld [vmem:[%s210] sm:$0xff]
      %v284 = vld [vmem:[%s210 + $0x8] sm:$0xff]
      %v285 = vld [vmem:[%s210 + $0x10] sm:$0xff]
      %v286 = vld [vmem:[%s210 + $0x18] sm:$0xff]
      %v287 = vld [vmem:[%s210 + $0x20] sm:$0xff]
      %v288 = vld [vmem:[%s210 + $0x28] sm:$0xff]
      %v289 = vld [vmem:[%s210 + $0x30] sm:$0xff]
      %v290 = vld [vmem:[%s210 + $0x38] sm:$0xff]
      %v291 = vld [vmem:[%s210 + $0x40] sm:$0xff]
      %v292 = vld [vmem:[%s210 + $0x48] sm:$0xff]
      %v293 = vld [vmem:[%s210 + $0x50] sm:$0xff]
      %v294 = vld [vmem:[%s210 + $0x58] sm:$0xff]
      %v295 = vld [vmem:[%s210 + $0x60] sm:$0xff]
      %v296 = vld [vmem:[%s210 + $0x68] sm:$0xff]
      %v297 = vld [vmem:[%s210 + $0x70] sm:$0xff]
      %v298 = vld [vmem:[%s210 + $0x78] sm:$0xff]
      %299 = vmatprep.subr.mxu0 0.0
      %300 = vmatpush1.msra.mxu0 %v283
      %301 = vmatprep.subr.mxu0 0.0
      %302 = vmatpush1.msra.mxu0 %v284
      %303 = vmatprep.subr.mxu0 0.0
      %304 = vmatpush1.msra.mxu0 %v285
      %305 = vmatprep.subr.mxu0 0.0
      %306 = vmatpush1.msra.mxu0 %v286
      %307 = vmatprep.subr.mxu0 0.0
      %308 = vmatpush1.msra.mxu0 %v287
      %309 = vmatprep.subr.mxu0 0.0
      %310 = vmatpush1.msra.mxu0 %v288
      %311 = vmatprep.subr.mxu0 0.0
      %312 = vmatpush1.msra.mxu0 %v289
      %313 = vmatprep.subr.mxu0 0.0
      %314 = vmatpush1.msra.mxu0 %v290
      %315 = vmatprep.subr.mxu0 0.0
      %316 = vmatpush1.msra.mxu0 %v291
      %317 = vmatprep.subr.mxu0 0.0
      %318 = vmatpush1.msra.mxu0 %v292
      %319 = vmatprep.subr.mxu0 0.0
      %320 = vmatpush1.msra.mxu0 %v293
      %321 = vmatprep.subr.mxu0 0.0
      %322 = vmatpush1.msra.mxu0 %v294
      %323 = vmatprep.subr.mxu0 0.0
      %324 = vmatpush1.msra.mxu0 %v295
      %325 = vmatprep.subr.mxu0 0.0
      %326 = vmatpush1.msra.mxu0 %v296
      %327 = vmatprep.subr.mxu0 0.0
      %328 = vmatpush1.msra.mxu0 %v297
      %329 = vmatprep.subr.mxu0 0.0
      %330 = vmatpush1.msra.mxu0 %v298
      %331 = vmatprep.subr.mxu0 0.0
      %332 = vmatpush1.msra.mxu0 0.0
      %333 = vmatprep.subr.mxu0 0.0
      %334 = vmatpush1.msra.mxu0 0.0
      %335 = vmatprep.subr.mxu0 0.0
      %336 = vmatpush1.msra.mxu0 0.0
      %337 = vmatprep.subr.mxu0 0.0
      %338 = vmatpush1.msra.mxu0 0.0
      %339 = vmatprep.subr.mxu0 0.0
      %340 = vmatpush1.msra.mxu0 0.0
      %341 = vmatprep.subr.mxu0 0.0
      %342 = vmatpush1.msra.mxu0 0.0
      %343 = vmatprep.subr.mxu0 0.0
      %344 = vmatpush1.msra.mxu0 0.0
      %345 = vmatprep.subr.mxu0 0.0
      %346 = vmatpush1.msra.mxu0 0.0
      %347 = vmatprep.subr.mxu0 0.0
      %348 = vmatpush1.msra.mxu0 0.0
      %349 = vmatprep.subr.mxu0 0.0
      %350 = vmatpush1.msra.mxu0 0.0
      %351 = vmatprep.subr.mxu0 0.0
      %352 = vmatpush1.msra.mxu0 0.0
      %353 = vmatprep.subr.mxu0 0.0
      %354 = vmatpush1.msra.mxu0 0.0
      %355 = vmatprep.subr.mxu0 0.0
      %356 = vmatpush1.msra.mxu0 0.0
      %357 = vmatprep.subr.mxu0 0.0
      %358 = vmatpush1.msra.mxu0 0.0
      %359 = vmatprep.subr.mxu0 0.0
      %360 = vmatpush1.msra.mxu0 0.0
      %361 = vmatprep.subr.mxu0 0.0
      %362 = vmatpush1.msra.mxu0 0.0
      %363 = vmatprep.mubr.f32.mxu0 0.0
      %364 = vmatmul.mubr.f32.gmra.mrb[0].mxu0 %v267
      %v365 = vpop.f32.mrb[0].mxu0
      %v366 = vadd.f32 0.0, %v365
      %v367 = vpop.f32.mrb[0].mxu0
      %368 = vmatprep.mubr.f32.mxu0 0.0
      %369 = vmatmul.mubr.f32.gmra.mrb[0].mxu0 %v268
      %v370 = vpop.f32.mrb[0].mxu0
      %v371 = vadd.f32 0.0, %v370
      %v372 = vpop.f32.mrb[0].mxu0
      %373 = vmatprep.mubr.f32.mxu0 0.0
      %374 = vmatmul.mubr.f32.gmra.mrb[0].mxu0 %v269
      %v375 = vpop.f32.mrb[0].mxu0
      %v376 = vadd.f32 0.0, %v375
      %v377 = vpop.f32.mrb[0].mxu0
      %378 = vmatprep.mubr.f32.mxu0 0.0
      %379 = vmatmul.mubr.f32.gmra.mrb[0].mxu0 %v270
      %v380 = vpop.f32.mrb[0].mxu0
      %v381 = vadd.f32 0.0, %v380
      %v382 = vpop.f32.mrb[0].mxu0
      %383 = vmatprep.mubr.f32.mxu0 0.0
      %384 = vmatmul.mubr.f32.gmra.mrb[0].mxu0 %v271
      %v385 = vpop.f32.mrb[0].mxu0
      %v386 = vadd.f32 0.0, %v385
      %v387 = vpop.f32.mrb[0].mxu0
      %388 = vmatprep.mubr.f32.mxu0 0.0
      %389 = vmatmul.mubr.f32.gmra.mrb[0].mxu0 %v272
      %v390 = vpop.f32.mrb[0].mxu0
      %v391 = vadd.f32 0.0, %v390
      %v392 = vpop.f32.mrb[0].mxu0
      %393 = vmatprep.mubr.f32.mxu0 0.0
      %394 = vmatmul.mubr.f32.gmra.mrb[0].mxu0 %v273
      %v395 = vpop.f32.mrb[0].mxu0
      %v396 = vadd.f32 0.0, %v395
      %v397 = vpop.f32.mrb[0].mxu0
      %398 = vmatprep.mubr.f32.mxu0 0.0
      %399 = vmatmul.mubr.f32.gmra.mrb[0].mxu0 %v274
      %v400 = vpop.f32.mrb[0].mxu0
      %v401 = vadd.f32 0.0, %v400
      %v402 = vpop.f32.mrb[0].mxu0
      %403 = vmatprep.mubr.f32.mxu0 0.0
      %404 = vmatmul.mubr.f32.gmra.mrb[0].mxu0 %v275
      %v405 = vpop.f32.mrb[0].mxu0
      %v406 = vadd.f32 0.0, %v405
      %v407 = vpop.f32.mrb[0].mxu0
      %408 = vmatprep.mubr.f32.mxu0 0.0
      %409 = vmatmul.mubr.f32.gmra.mrb[0].mxu0 %v276
      %v410 = vpop.f32.mrb[0].mxu0
      %v411 = vadd.f32 0.0, %v410
      %v412 = vpop.f32.mrb[0].mxu0
      %413 = vmatprep.mubr.f32.mxu0 0.0
      %414 = vmatmul.mubr.f32.gmra.mrb[0].mxu0 %v277
      %v415 = vpop.f32.mrb[0].mxu0
      %v416 = vadd.f32 0.0, %v415
      %v417 = vpop.f32.mrb[0].mxu0
      %418 = vmatprep.mubr.f32.mxu0 0.0
      %419 = vmatmul.mubr.f32.gmra.mrb[0].mxu0 %v278
      %v420 = vpop.f32.mrb[0].mxu0
      %v421 = vadd.f32 0.0, %v420
      %v422 = vpop.f32.mrb[0].mxu0
      %423 = vmatprep.mubr.f32.mxu0 0.0
      %424 = vmatmul.mubr.f32.gmra.mrb[0].mxu0 %v279
      %v425 = vpop.f32.mrb[0].mxu0
      %v426 = vadd.f32 0.0, %v425
      %v427 = vpop.f32.mrb[0].mxu0
      %428 = vmatprep.mubr.f32.mxu0 0.0
      %429 = vmatmul.mubr.f32.gmra.mrb[0].mxu0 %v280
      %v430 = vpop.f32.mrb[0].mxu0
      %v431 = vadd.f32 0.0, %v430
      %v432 = vpop.f32.mrb[0].mxu0
      %433 = vmatprep.mubr.f32.mxu0 0.0
      %434 = vmatmul.mubr.f32.gmra.mrb[0].mxu0 %v281
      %v435 = vpop.f32.mrb[0].mxu0
      %v436 = vadd.f32 0.0, %v435
      %v437 = vpop.f32.mrb[0].mxu0
      %438 = vmatprep.mubr.f32.mxu0 0.0
      %439 = vmatmul.mubr.f32.gmra.mrb[0].mxu0 %v282
      %v440 = vpop.f32.mrb[0].mxu0
      %v441 = vadd.f32 0.0, %v440
      %v442 = vpop.f32.mrb[0].mxu0
      %443 = vdwg.mxu0
      %v444 = vld [vmem:[%s3] sm:$0xf]
      %v445 = vld [vmem:[%s3 + $0x4] sm:$0xf]
      %v446 = vld [vmem:[%s3 + $0x8] sm:$0xf]
      %v447 = vld [vmem:[%s3 + $0xc] sm:$0xf]
      %v448 = vld [vmem:[%s3 + $0x10] sm:$0xf]
      %v449 = vld [vmem:[%s3 + $0x14] sm:$0xf]
      %v450 = vld [vmem:[%s3 + $0x18] sm:$0xf]
      %v451 = vld [vmem:[%s3 + $0x1c] sm:$0xf]
      %v452 = vld [vmem:[%s3 + $0x20] sm:$0xf]
      %v453 = vld [vmem:[%s3 + $0x24] sm:$0xf]
      %v454 = vld [vmem:[%s3 + $0x28] sm:$0xf]
      %v455 = vld [vmem:[%s3 + $0x2c] sm:$0xf]
      %v456 = vld [vmem:[%s3 + $0x30] sm:$0xf]
      %v457 = vld [vmem:[%s3 + $0x34] sm:$0xf]
      %v458 = vld [vmem:[%s3 + $0x38] sm:$0xf]
      %v459 = vld [vmem:[%s3 + $0x3c] sm:$0xf]
      %v460 = vpack.c.bf16 %v371, %v366
      %v461 = vpack.c.bf16 %v381, %v376
      %v462 = vpack.c.bf16 %v391, %v386
      %v463 = vpack.c.bf16 %v401, %v396
      %v464 = vpack.c.bf16 %v411, %v406
      %v465 = vpack.c.bf16 %v421, %v416
      %v466 = vpack.c.bf16 %v431, %v426
      %v467 = vpack.c.bf16 %v441, %v436
      %v468 = vld [vmem:[%s213] sm:$0x1]
      %v470 = vlaneseq
      %v471 = vshrl.u32 %v470, 7
      %v472 = vsub.s32 0, %v471
      %v473 = vrot.slane %v468, %v472
      %v491 = vunpack.c.l.b16 %v444
      %v492 = vunpack.c.l.b16 %v445
      %v493 = vunpack.c.l.b16 %v446
      %v494 = vunpack.c.l.b16 %v447
      %v495 = vunpack.c.l.b16 %v448
      %v496 = vunpack.c.l.b16 %v449
      %v497 = vunpack.c.l.b16 %v450
      %v498 = vunpack.c.l.b16 %v451
      %v499 = vunpack.c.l.b16 %v452
      %v500 = vunpack.c.l.b16 %v453
      %v501 = vunpack.c.l.b16 %v454
      %v502 = vunpack.c.l.b16 %v455
      %v503 = vunpack.c.l.b16 %v456
      %v504 = vunpack.c.l.b16 %v457
      %v505 = vunpack.c.l.b16 %v458
      %v506 = vunpack.c.l.b16 %v459
      %v507 = vpack.c.b16 %v492, %v491
      %v508 = vpack.c.b16 %v494, %v493
      %v509 = vpack.c.b16 %v496, %v495
      %v510 = vpack.c.b16 %v498, %v497
      %v511 = vpack.c.b16 %v500, %v499
      %v512 = vpack.c.b16 %v502, %v501
      %v513 = vpack.c.b16 %v504, %v503
      %v514 = vpack.c.b16 %v506, %v505
      %523 = vmatprep.subr.bf16.mxu0 0
      %524 = vmatpush1.bf16.msra.mxu0 %v460
      %525 = vmatprep.subr.bf16.mxu0 0
      %526 = vmatpush1.bf16.msra.mxu0 %v461
      %527 = vmatprep.subr.bf16.mxu0 0
      %528 = vmatpush1.bf16.msra.mxu0 %v462
      %529 = vmatprep.subr.bf16.mxu0 0
      %530 = vmatpush1.bf16.msra.mxu0 %v463
      %531 = vmatprep.subr.bf16.mxu0 0
      %532 = vmatpush1.bf16.msra.mxu0 %v464
      %533 = vmatprep.subr.bf16.mxu0 0
      %534 = vmatpush1.bf16.msra.mxu0 %v465
      %535 = vmatprep.subr.bf16.mxu0 0
      %536 = vmatpush1.bf16.msra.mxu0 %v466
      %537 = vmatprep.subr.bf16.mxu0 0
      %538 = vmatpush1.bf16.msra.mxu0 %v467
      %539 = vmatprep.subr.bf16.mxu0 0
      %540 = vmatpush1.bf16.msra.mxu0 0
      %541 = vmatprep.subr.bf16.mxu0 0
      %542 = vmatpush1.bf16.msra.mxu0 0
      %543 = vmatprep.subr.bf16.mxu0 0
      %544 = vmatpush1.bf16.msra.mxu0 0
      %545 = vmatprep.subr.bf16.mxu0 0
      %546 = vmatpush1.bf16.msra.mxu0 0
      %547 = vmatprep.subr.bf16.mxu0 0
      %548 = vmatpush1.bf16.msra.mxu0 0
      %549 = vmatprep.subr.bf16.mxu0 0
      %550 = vmatpush1.bf16.msra.mxu0 0
      %551 = vmatprep.subr.bf16.mxu0 0
      %552 = vmatpush1.bf16.msra.mxu0 0
      %553 = vmatprep.subr.bf16.mxu0 0
      %554 = vmatpush1.bf16.msra.mxu0 0
      %555 = vmatprep.mubr.bf16.mxu0 0
      %556 = vmatmul.mubr.bf16.gmra.mrb[0].mxu0 %v507
      %v557 = vpop.f32.mrb[0].mxu0
      %v558 = vadd.f32 %v473, %v557
      %v559 = vpop.f32.mrb[0].mxu0
      %v560 = vpop.f32.mrb[0].mxu0
      %v561 = vadd.f32 %v473, %v560
      %v562 = vpop.f32.mrb[0].mxu0
      %563 = vmatprep.mubr.bf16.mxu0 0
      %564 = vmatmul.mubr.bf16.gmra.mrb[0].mxu0 %v508
      %v565 = vpop.f32.mrb[0].mxu0
      %v566 = vadd.f32 %v473, %v565
      %v567 = vpop.f32.mrb[0].mxu0
      %v568 = vpop.f32.mrb[0].mxu0
      %v569 = vadd.f32 %v473, %v568
      %v570 = vpop.f32.mrb[0].mxu0
      %571 = vmatprep.mubr.bf16.mxu0 0
      %572 = vmatmul.mubr.bf16.gmra.mrb[0].mxu0 %v509
      %v573 = vpop.f32.mrb[0].mxu0
      %v574 = vadd.f32 %v473, %v573
      %v575 = vpop.f32.mrb[0].mxu0
      %v576 = vpop.f32.mrb[0].mxu0
      %v577 = vadd.f32 %v473, %v576
      %v578 = vpop.f32.mrb[0].mxu0
      %579 = vmatprep.mubr.bf16.mxu0 0
      %580 = vmatmul.mubr.bf16.gmra.mrb[0].mxu0 %v510
      %v581 = vpop.f32.mrb[0].mxu0
      %v582 = vadd.f32 %v473, %v581
      %v583 = vpop.f32.mrb[0].mxu0
      %v584 = vpop.f32.mrb[0].mxu0
      %v585 = vadd.f32 %v473, %v584
      %v586 = vpop.f32.mrb[0].mxu0
      %587 = vmatprep.mubr.bf16.mxu0 0
      %588 = vmatmul.mubr.bf16.gmra.mrb[0].mxu0 %v511
      %v589 = vpop.f32.mrb[0].mxu0
      %v590 = vadd.f32 %v473, %v589
      %v591 = vpop.f32.mrb[0].mxu0
      %v592 = vpop.f32.mrb[0].mxu0
      %v593 = vadd.f32 %v473, %v592
      %v594 = vpop.f32.mrb[0].mxu0
      %595 = vmatprep.mubr.bf16.mxu0 0
      %596 = vmatmul.mubr.bf16.gmra.mrb[0].mxu0 %v512
      %v597 = vpop.f32.mrb[0].mxu0
      %v598 = vadd.f32 %v473, %v597
      %v599 = vpop.f32.mrb[0].mxu0
      %v600 = vpop.f32.mrb[0].mxu0
      %v601 = vadd.f32 %v473, %v600
      %v602 = vpop.f32.mrb[0].mxu0
      %603 = vmatprep.mubr.bf16.mxu0 0
      %604 = vmatmul.mubr.bf16.gmra.mrb[0].mxu0 %v513
      %v605 = vpop.f32.mrb[0].mxu0
      %v606 = vadd.f32 %v473, %v605
      %v607 = vpop.f32.mrb[0].mxu0
      %v608 = vpop.f32.mrb[0].mxu0
      %v609 = vadd.f32 %v473, %v608
      %v610 = vpop.f32.mrb[0].mxu0
      %611 = vmatprep.mubr.bf16.mxu0 0
      %612 = vmatmul.mubr.bf16.gmra.mrb[0].mxu0 %v514
      %v613 = vpop.f32.mrb[0].mxu0
      %v614 = vadd.f32 %v473, %v613
      %v615 = vpop.f32.mrb[0].mxu0
      %v616 = vpop.f32.mrb[0].mxu0
      %v617 = vadd.f32 %v473, %v616
      %v618 = vpop.f32.mrb[0].mxu0
      %619 = vdwg.mxu0
      %620 = vst [vmem:[#allocation2] sm:$0xff] %v558
      %621 = vst [vmem:[#allocation2 + $0x8] sm:$0xff] %v561
      %622 = vst [vmem:[#allocation2 + $0x10] sm:$0xff] %v566
      %623 = vst [vmem:[#allocation2 + $0x18] sm:$0xff] %v569
      %624 = vst [vmem:[#allocation2 + $0x20] sm:$0xff] %v574
      %625 = vst [vmem:[#allocation2 + $0x28] sm:$0xff] %v577
      %626 = vst [vmem:[#allocation2 + $0x30] sm:$0xff] %v582
      %627 = vst [vmem:[#allocation2 + $0x38] sm:$0xff] %v585
      %628 = vst [vmem:[#allocation2 + $0x40] sm:$0xff] %v590
      %629 = vst [vmem:[#allocation2 + $0x48] sm:$0xff] %v593
      %630 = vst [vmem:[#allocation2 + $0x50] sm:$0xff] %v598
      %631 = vst [vmem:[#allocation2 + $0x58] sm:$0xff] %v601
      %632 = vst [vmem:[#allocation2 + $0x60] sm:$0xff] %v606
      %633 = vst [vmem:[#allocation2 + $0x68] sm:$0xff] %v609
      %634 = vst [vmem:[#allocation2 + $0x70] sm:$0xff] %v614
      %635 = vst [vmem:[#allocation2 + $0x78] sm:$0xff] %v617
      %s636 = sld [smem:[#allocation5 + %s32]]
      %p637 = scmp.eq.s32.totalorder %s636, 1
      // Predicated region
      $region41: #{parc_reduced_forward.21} parent=35 // pred_check
        %p638 = pneg %p637
      $region42: #{parc_reduced_forward.21} parent=35 // pred_check_branch
        %640 = sbr.rel (%p638) target = $region44
      $region43: #{parc_reduced_forward.21} parent=35 // pred_region
        %v641 = vld [vmem:[#allocation2] sm:$0xff]
        %v642 = vld [vmem:[#allocation2 + $0x8] sm:$0xff]
        %v643 = vld [vmem:[#allocation2 + $0x10] sm:$0xff]
        %v644 = vld [vmem:[#allocation2 + $0x18] sm:$0xff]
        %v645 = vld [vmem:[#allocation2 + $0x20] sm:$0xff]
        %v646 = vld [vmem:[#allocation2 + $0x28] sm:$0xff]
        %v647 = vld [vmem:[#allocation2 + $0x30] sm:$0xff]
        %v648 = vld [vmem:[#allocation2 + $0x38] sm:$0xff]
        %v649 = vld [vmem:[#allocation2 + $0x40] sm:$0xff]
        %v650 = vld [vmem:[#allocation2 + $0x48] sm:$0xff]
        %v651 = vld [vmem:[#allocation2 + $0x50] sm:$0xff]
        %v652 = vld [vmem:[#allocation2 + $0x58] sm:$0xff]
        %v653 = vld [vmem:[#allocation2 + $0x60] sm:$0xff]
        %v654 = vld [vmem:[#allocation2 + $0x68] sm:$0xff]
        %v655 = vld [vmem:[#allocation2 + $0x70] sm:$0xff]
        %v656 = vld [vmem:[#allocation2 + $0x78] sm:$0xff]
        %v657 = vmax.f32 %v641, 0.0
        %v658 = vmax.f32 %v642, 0.0
        %v659 = vmax.f32 %v643, 0.0
        %v660 = vmax.f32 %v644, 0.0
        %v661 = vmax.f32 %v645, 0.0
        %v662 = vmax.f32 %v646, 0.0
        %v663 = vmax.f32 %v647, 0.0
        %v664 = vmax.f32 %v648, 0.0
        %v665 = vmax.f32 %v649, 0.0
        %v666 = vmax.f32 %v650, 0.0
        %v667 = vmax.f32 %v651, 0.0
        %v668 = vmax.f32 %v652, 0.0
        %v669 = vmax.f32 %v653, 0.0
        %v670 = vmax.f32 %v654, 0.0
        %v671 = vmax.f32 %v655, 0.0
        %v672 = vmax.f32 %v656, 0.0
        %673 = vst [vmem:[#allocation2] sm:$0xff] %v657
        %674 = vst [vmem:[#allocation2 + $0x8] sm:$0xff] %v658
        %675 = vst [vmem:[#allocation2 + $0x10] sm:$0xff] %v659
        %676 = vst [vmem:[#allocation2 + $0x18] sm:$0xff] %v660
        %677 = vst [vmem:[#allocation2 + $0x20] sm:$0xff] %v661
        %678 = vst [vmem:[#allocation2 + $0x28] sm:$0xff] %v662
        %679 = vst [vmem:[#allocation2 + $0x30] sm:$0xff] %v663
        %680 = vst [vmem:[#allocation2 + $0x38] sm:$0xff] %v664
        %681 = vst [vmem:[#allocation2 + $0x40] sm:$0xff] %v665
        %682 = vst [vmem:[#allocation2 + $0x48] sm:$0xff] %v666
        %683 = vst [vmem:[#allocation2 + $0x50] sm:$0xff] %v667
        %684 = vst [vmem:[#allocation2 + $0x58] sm:$0xff] %v668
        %685 = vst [vmem:[#allocation2 + $0x60] sm:$0xff] %v669
        %686 = vst [vmem:[#allocation2 + $0x68] sm:$0xff] %v670
        %687 = vst [vmem:[#allocation2 + $0x70] sm:$0xff] %v671
        %688 = vst [vmem:[#allocation2 + $0x78] sm:$0xff] %v672
      $region44: #{parc_reduced_forward.21} parent=35 // pred_fallthru
        _
      %s689 = sld [smem:[#allocation6 + %s32]]
      %p690 = scmp.eq.s32.totalorder %s689, 1
      // Predicated region
      $region45: #{parc_reduced_forward.21} parent=35 // pred_check
        %p691 = pneg %p690
      $region46: #{parc_reduced_forward.21} parent=35 // pred_check_branch
        %693 = sbr.rel (%p691) target = $region48
      $region47: #{parc_reduced_forward.21} parent=35 // pred_region
        %v694 = vld [vmem:[#allocation2] sm:$0xff]
        %v695 = vld [vmem:[#allocation2 + $0x8] sm:$0xff]
        %v696 = vld [vmem:[#allocation2 + $0x10] sm:$0xff]
        %v697 = vld [vmem:[#allocation2 + $0x18] sm:$0xff]
        %v698 = vld [vmem:[#allocation2 + $0x20] sm:$0xff]
        %v699 = vld [vmem:[#allocation2 + $0x28] sm:$0xff]
        %v700 = vld [vmem:[#allocation2 + $0x30] sm:$0xff]
        %v701 = vld [vmem:[#allocation2 + $0x38] sm:$0xff]
        %v702 = vld [vmem:[#allocation2 + $0x40] sm:$0xff]
        %v703 = vld [vmem:[#allocation2 + $0x48] sm:$0xff]
        %v704 = vld [vmem:[#allocation2 + $0x50] sm:$0xff]
        %v705 = vld [vmem:[#allocation2 + $0x58] sm:$0xff]
        %v706 = vld [vmem:[#allocation2 + $0x60] sm:$0xff]
        %v707 = vld [vmem:[#allocation2 + $0x68] sm:$0xff]
        %v708 = vld [vmem:[#allocation2 + $0x70] sm:$0xff]
        %v709 = vld [vmem:[#allocation2 + $0x78] sm:$0xff]
        %710 = vst [vmem:[#allocation3] sm:$0xff] %v694
        %711 = vst [vmem:[#allocation3 + $0x8] sm:$0xff] %v695
        %712 = vst [vmem:[#allocation3 + $0x10] sm:$0xff] %v696
        %713 = vst [vmem:[#allocation3 + $0x18] sm:$0xff] %v697
        %714 = vst [vmem:[#allocation3 + $0x20] sm:$0xff] %v698
        %715 = vst [vmem:[#allocation3 + $0x28] sm:$0xff] %v699
        %716 = vst [vmem:[#allocation3 + $0x30] sm:$0xff] %v700
        %717 = vst [vmem:[#allocation3 + $0x38] sm:$0xff] %v701
        %718 = vst [vmem:[#allocation3 + $0x40] sm:$0xff] %v702
        %719 = vst [vmem:[#allocation3 + $0x48] sm:$0xff] %v703
        %720 = vst [vmem:[#allocation3 + $0x50] sm:$0xff] %v704
        %721 = vst [vmem:[#allocation3 + $0x58] sm:$0xff] %v705
        %722 = vst [vmem:[#allocation3 + $0x60] sm:$0xff] %v706
        %723 = vst [vmem:[#allocation3 + $0x68] sm:$0xff] %v707
        %724 = vst [vmem:[#allocation3 + $0x70] sm:$0xff] %v708
        %725 = vst [vmem:[#allocation3 + $0x78] sm:$0xff] %v709
      $region48: #{parc_reduced_forward.21} parent=35 // pred_fallthru
        _
      %s726 = sld [smem:[#allocation7 + %s32]]
      %p727 = scmp.eq.s32.totalorder %s726, 1
      // Predicated region
      $region49: #{parc_reduced_forward.21} parent=35 // pred_check
        %p728 = pneg %p727
      $region50: #{parc_reduced_forward.21} parent=35 // pred_check_branch
        %730 = sbr.rel (%p728) target = $region52
      $region51: #{parc_reduced_forward.21} parent=35 // pred_region
        %v731 = vld [vmem:[#allocation2] sm:$0xff]
        %v732 = vld [vmem:[#allocation2 + $0x8] sm:$0xff]
        %v733 = vld [vmem:[#allocation2 + $0x10] sm:$0xff]
        %v734 = vld [vmem:[#allocation2 + $0x18] sm:$0xff]
        %v735 = vld [vmem:[#allocation2 + $0x20] sm:$0xff]
        %v736 = vld [vmem:[#allocation2 + $0x28] sm:$0xff]
        %v737 = vld [vmem:[#allocation2 + $0x30] sm:$0xff]
        %v738 = vld [vmem:[#allocation2 + $0x38] sm:$0xff]
        %v739 = vld [vmem:[#allocation2 + $0x40] sm:$0xff]
        %v740 = vld [vmem:[#allocation2 + $0x48] sm:$0xff]
        %v741 = vld [vmem:[#allocation2 + $0x50] sm:$0xff]
        %v742 = vld [vmem:[#allocation2 + $0x58] sm:$0xff]
        %v743 = vld [vmem:[#allocation2 + $0x60] sm:$0xff]
        %v744 = vld [vmem:[#allocation2 + $0x68] sm:$0xff]
        %v745 = vld [vmem:[#allocation2 + $0x70] sm:$0xff]
        %v746 = vld [vmem:[#allocation2 + $0x78] sm:$0xff]
        %v747 = vld [vmem:[#allocation3] sm:$0xff]
        %v748 = vld [vmem:[#allocation3 + $0x8] sm:$0xff]
        %v749 = vld [vmem:[#allocation3 + $0x10] sm:$0xff]
        %v750 = vld [vmem:[#allocation3 + $0x18] sm:$0xff]
        %v751 = vld [vmem:[#allocation3 + $0x20] sm:$0xff]
        %v752 = vld [vmem:[#allocation3 + $0x28] sm:$0xff]
        %v753 = vld [vmem:[#allocation3 + $0x30] sm:$0xff]
        %v754 = vld [vmem:[#allocation3 + $0x38] sm:$0xff]
        %v755 = vld [vmem:[#allocation3 + $0x40] sm:$0xff]
        %v756 = vld [vmem:[#allocation3 + $0x48] sm:$0xff]
        %v757 = vld [vmem:[#allocation3 + $0x50] sm:$0xff]
        %v758 = vld [vmem:[#allocation3 + $0x58] sm:$0xff]
        %v759 = vld [vmem:[#allocation3 + $0x60] sm:$0xff]
        %v760 = vld [vmem:[#allocation3 + $0x68] sm:$0xff]
        %v761 = vld [vmem:[#allocation3 + $0x70] sm:$0xff]
        %v762 = vld [vmem:[#allocation3 + $0x78] sm:$0xff]
        %v763 = vadd.f32 %v731, %v747
        %v764 = vadd.f32 %v732, %v748
        %v765 = vadd.f32 %v733, %v749
        %v766 = vadd.f32 %v734, %v750
        %v767 = vadd.f32 %v735, %v751
        %v768 = vadd.f32 %v736, %v752
        %v769 = vadd.f32 %v737, %v753
        %v770 = vadd.f32 %v738, %v754
        %v771 = vadd.f32 %v739, %v755
        %v772 = vadd.f32 %v740, %v756
        %v773 = vadd.f32 %v741, %v757
        %v774 = vadd.f32 %v742, %v758
        %v775 = vadd.f32 %v743, %v759
        %v776 = vadd.f32 %v744, %v760
        %v777 = vadd.f32 %v745, %v761
        %v778 = vadd.f32 %v746, %v762
        %v779 = vmax.f32 %v763, 0.0
        %v780 = vmax.f32 %v764, 0.0
        %v781 = vmax.f32 %v765, 0.0
        %v782 = vmax.f32 %v766, 0.0
        %v783 = vmax.f32 %v767, 0.0
        %v784 = vmax.f32 %v768, 0.0
        %v785 = vmax.f32 %v769, 0.0
        %v786 = vmax.f32 %v770, 0.0
        %v787 = vmax.f32 %v771, 0.0
        %v788 = vmax.f32 %v772, 0.0
        %v789 = vmax.f32 %v773, 0.0
        %v790 = vmax.f32 %v774, 0.0
        %v791 = vmax.f32 %v775, 0.0
        %v792 = vmax.f32 %v776, 0.0
        %v793 = vmax.f32 %v777, 0.0
        %v794 = vmax.f32 %v778, 0.0
        %795 = vst [vmem:[#allocation2] sm:$0xff] %v779
        %796 = vst [vmem:[#allocation2 + $0x8] sm:$0xff] %v780
        %797 = vst [vmem:[#allocation2 + $0x10] sm:$0xff] %v781
        %798 = vst [vmem:[#allocation2 + $0x18] sm:$0xff] %v782
        %799 = vst [vmem:[#allocation2 + $0x20] sm:$0xff] %v783
        %800 = vst [vmem:[#allocation2 + $0x28] sm:$0xff] %v784
        %801 = vst [vmem:[#allocation2 + $0x30] sm:$0xff] %v785
        %802 = vst [vmem:[#allocation2 + $0x38] sm:$0xff] %v786
        %803 = vst [vmem:[#allocation2 + $0x40] sm:$0xff] %v787
        %804 = vst [vmem:[#allocation2 + $0x48] sm:$0xff] %v788
        %805 = vst [vmem:[#allocation2 + $0x50] sm:$0xff] %v789
        %806 = vst [vmem:[#allocation2 + $0x58] sm:$0xff] %v790
        %807 = vst [vmem:[#allocation2 + $0x60] sm:$0xff] %v791
        %808 = vst [vmem:[#allocation2 + $0x68] sm:$0xff] %v792
        %809 = vst [vmem:[#allocation2 + $0x70] sm:$0xff] %v793
        %810 = vst [vmem:[#allocation2 + $0x78] sm:$0xff] %v794
      $region52: #{parc_reduced_forward.21} parent=35 // pred_fallthru
        _
      %p811 = scmp.eq.s32.totalorder %s32, 9
      // Predicated region
      $region53: #{parc_reduced_forward.21} parent=35 // pred_check
        %p812 = pneg %p811
      $region54: #{parc_reduced_forward.21} parent=35 // pred_check_branch
        %814 = sbr.rel (%p812) target = $region56
      $region55: #{parc_reduced_forward.21} parent=35 // pred_region
        %v815 = vld [vmem:[#allocation2] sm:$0xff]
        %v816 = vld [vmem:[#allocation2 + $0x8] sm:$0xff]
        %v817 = vld [vmem:[#allocation2 + $0x10] sm:$0xff]
        %v818 = vld [vmem:[#allocation2 + $0x18] sm:$0xff]
        %v819 = vld [vmem:[#allocation2 + $0x20] sm:$0xff]
        %v820 = vld [vmem:[#allocation2 + $0x28] sm:$0xff]
        %v821 = vld [vmem:[#allocation2 + $0x30] sm:$0xff]
        %v822 = vld [vmem:[#allocation2 + $0x38] sm:$0xff]
        %v823 = vld [vmem:[#allocation2 + $0x40] sm:$0xff]
        %v824 = vld [vmem:[#allocation2 + $0x48] sm:$0xff]
        %v825 = vld [vmem:[#allocation2 + $0x50] sm:$0xff]
        %v826 = vld [vmem:[#allocation2 + $0x58] sm:$0xff]
        %v827 = vld [vmem:[#allocation2 + $0x60] sm:$0xff]
        %v828 = vld [vmem:[#allocation2 + $0x68] sm:$0xff]
        %v829 = vld [vmem:[#allocation2 + $0x70] sm:$0xff]
        %v830 = vld [vmem:[#allocation2 + $0x78] sm:$0xff]
        %831 = vst [vmem:[%s7] sm:$0xff] %v815
        %832 = vst [vmem:[%s7 + $0x8] sm:$0xff] %v816
        %833 = vst [vmem:[%s7 + $0x10] sm:$0xff] %v817
        %834 = vst [vmem:[%s7 + $0x18] sm:$0xff] %v818
        %835 = vst [vmem:[%s7 + $0x20] sm:$0xff] %v819
        %836 = vst [vmem:[%s7 + $0x28] sm:$0xff] %v820
        %837 = vst [vmem:[%s7 + $0x30] sm:$0xff] %v821
        %838 = vst [vmem:[%s7 + $0x38] sm:$0xff] %v822
        %839 = vst [vmem:[%s7 + $0x40] sm:$0xff] %v823
        %840 = vst [vmem:[%s7 + $0x48] sm:$0xff] %v824
        %841 = vst [vmem:[%s7 + $0x50] sm:$0xff] %v825
        %842 = vst [vmem:[%s7 + $0x58] sm:$0xff] %v826
        %843 = vst [vmem:[%s7 + $0x60] sm:$0xff] %v827
        %844 = vst [vmem:[%s7 + $0x68] sm:$0xff] %v828
        %845 = vst [vmem:[%s7 + $0x70] sm:$0xff] %v829
        %846 = vst [vmem:[%s7 + $0x78] sm:$0xff] %v830
      $region56: #{parc_reduced_forward.21} parent=35 // pred_fallthru
        _
      // Predicated region
      $region57: #{parc_reduced_forward.21} parent=35 // pred_check
        %p847 = pneg %p139
      $region58: #{parc_reduced_forward.21} parent=35 // pred_check_branch
        %849 = sbr.rel (%p847) target = $region60
      $region59: #{parc_reduced_forward.21} parent=35 // pred_region
        _
      $region60: #{parc_reduced_forward.21} parent=35 // pred_fallthru
        _
      // Predicated region
      $region61: #{parc_reduced_forward.21} parent=35 // pred_check
        %p850 = pneg %p139
      $region62: #{parc_reduced_forward.21} parent=35 // pred_check_branch
        %852 = sbr.rel (%p850) target = $region64
      $region63: #{parc_reduced_forward.21} parent=35 // pred_region
        _
      $region64: #{parc_reduced_forward.21} parent=35 // pred_fallthru
        _
    $region36: #{parc_reduced_forward.21} parent=5 // pred_fallthru
      _
    %p853 = scmp.le.s32.totalorder 2, %s27
    // Predicated region
    $region65: #{parc_reduced_forward.21} parent=5 // pred_check
      %p854 = pneg %p853
    $region66: #{parc_reduced_forward.21} parent=5 // pred_check_branch
      %856 = sbr.rel (%p854) target = $region68
    $region67: #{parc_reduced_forward.21} parent=5 // pred_region
      %s857 = ssub.s32 %s27, 2
    $region68: #{parc_reduced_forward.21} parent=5 // pred_fallthru
      _
  $region6: #{parc_reduced_forward.21} parent=0 // loop_footer
    %s31 = sadd.s32 1, %s27
  $region7: #{parc_reduced_forward.21} parent=0 // loop_footer_branch
    %26 = sbr.rel target = $region3
  $region8: #{parc_reduced_forward.21} parent=0 // loop_exit
    _

</llo_original>
